<compile_context>
chip_gen: v5e
topology: v5e:2x2
jax: 0.10.0
libtpu: 0.0.40
codegen_flags: <defaults>
</compile_context>

<pallas_src>
import functools
import math

import jax
import jax.numpy as jnp
from jax.experimental import pallas as pl
from jax.experimental.pallas import tpu as pltpu

# ---- small synthetic config (finbert is bert-base; scaled down here) ----
VOCAB = 128
MAX_POS = 16
HIDDEN = 32
N_HEADS = 4
HEAD_DIM = HIDDEN // N_HEADS
N_LAYERS = 2
INTERMEDIATE = 64
N_CLASSES = 3
LN_EPS = 1e-12

# Activation / weight-matrix storage dtype (MXU inputs). Internal math stays f32.
ACT_DTYPE = jnp.bfloat16

# Row-tile for the FFN / LayerNorm kernels.  256 keeps the full-H-resident
# fused-LN design inside v7x's 32 MiB scoped VMEM even at BERT-base sizes;
# v6e/v5e (128 MiB VMEM) could go larger.
TM = 256


# ----------------------------- Pallas kernels -----------------------------

def _attention_block_kernel(h_ref, mask_ref, qkv_w_ref, qkv_b_ref,
                            o_w_ref, o_b_ref, g_ref, b_ref,
                            o_ref, ctx_ref, *, n_heads, head_dim):
    """One full attention block for one batch element.

    Fuses: QKV projection -> per-head softmax attention -> out-projection
    -> residual -> LayerNorm.  All MXU operands are bf16; softmax/LN math f32.
    Per-head context is written straight into its lane slice of a VMEM scratch
    (no concatenate / relayout).  The 1/sqrt(Dh) scale is pre-folded into the
    Q columns of qkv_w / qkv_b.
    """
    H = n_heads * head_dim
    x = h_ref[0]                                           # (S, H) bf16
    mask = mask_ref[0]                                     # (1, S) additive f32

    # fused QKV projection (bf16 MXU inputs, f32 accumulate)
    qkv = (jnp.dot(x, qkv_w_ref[...], preferred_element_type=jnp.float32)
           + qkv_b_ref[...]).astype(x.dtype)               # (S, 3H) bf16

    # TODO(synk): for non-toy S, replace the full (S,S) score matrix with
    # flash-style KV tiling (online softmax) and grid over (B, head / q-tile).
    for hd in range(n_heads):                              # static unroll
        q = qkv[:, hd * head_dim:(hd + 1) * head_dim]              # bf16
        k = qkv[:, H + hd * head_dim:H + (hd + 1) * head_dim]      # bf16
        v = qkv[:, 2 * H + hd * head_dim:2 * H + (hd + 1) * head_dim]
        scores = jax.lax.dot_general(
            q, k, (((1,), (1,)), ((), ())),
            preferred_element_type=jnp.float32) + mask             # (S, S) f32
        smax = jnp.max(scores, axis=-1, keepdims=True)
        p = jnp.exp(scores - smax)
        denom = jnp.sum(p, axis=-1, keepdims=True)
        probs = (p * pl.reciprocal(denom, approx=True)).astype(x.dtype)  # bf16
        ctx_ref[:, hd * head_dim:(hd + 1) * head_dim] = jnp.dot(
            probs, v, preferred_element_type=jnp.float32).astype(ctx_ref.dtype)

    # fused: out-proj + residual + LayerNorm (f32 math, single store)
    y = (jnp.dot(ctx_ref[...], o_w_ref[...], preferred_element_type=jnp.float32)
         + o_b_ref[...] + x.astype(jnp.float32))
    mean = jnp.mean(y, axis=-1, keepdims=True)
    var = jnp.mean((y - mean) ** 2, axis=-1, keepdims=True)
    inv = jax.lax.rsqrt(var + LN_EPS)
    o_ref[0] = ((y - mean) * inv * g_ref[...] + b_ref[...]).astype(o_ref.dtype)


def attention_block(h, add_mask, qkv_w, qkv_b, o_w, o_b, ln_g, ln_b):
    """h: (B, S, H) bf16; add_mask: (B, 1, S) additive f32 mask."""
    B, S, H = h.shape
    threeH = qkv_w.shape[1]
    return pl.pallas_call(
        functools.partial(_attention_block_kernel,
                          n_heads=N_HEADS, head_dim=HEAD_DIM),
        out_shape=jax.ShapeDtypeStruct((B, S, H), h.dtype),
        grid=(B,),
        in_specs=[
            pl.BlockSpec((1, S, H), lambda b: (b, 0, 0)),
            pl.BlockSpec((1, 1, S), lambda b: (b, 0, 0)),
            pl.BlockSpec((H, threeH), lambda b: (0, 0)),     # same block every step -> no re-DMA
            pl.BlockSpec((1, threeH), lambda b: (0, 0)),
            pl.BlockSpec((H, H), lambda b: (0, 0)),
            pl.BlockSpec((1, H), lambda b: (0, 0)),
            pl.BlockSpec((1, H), lambda b: (0, 0)),
            pl.BlockSpec((1, H), lambda b: (0, 0)),
        ],
        out_specs=pl.BlockSpec((1, S, H), lambda b: (b, 0, 0)),
        scratch_shapes=[pltpu.VMEM((S, H), ACT_DTYPE)],
        compiler_params=pltpu.CompilerParams(dimension_semantics=("parallel",)),
    )(h, add_mask, qkv_w, qkv_b.reshape(1, threeH), o_w, o_b.reshape(1, H),
      ln_g.reshape(1, H), ln_b.reshape(1, H))


def _ffn_block_kernel(h_ref, iw_ref, ib_ref, fw_ref, fb_ref, g_ref, b_ref, o_ref):
    """Fused FFN block: up-proj + GELU + down-proj + residual + LayerNorm."""
    x = h_ref[...]                                           # (tm, H) bf16
    inter = (jnp.dot(x, iw_ref[...], preferred_element_type=jnp.float32)
             + ib_ref[...])
    # TODO(synk): BERT uses exact erf-GELU; tanh approximation used here.
    inter = jax.nn.gelu(inter, approximate=True).astype(x.dtype)   # bf16 for 2nd matmul
    y = (jnp.dot(inter, fw_ref[...], preferred_element_type=jnp.float32)
         + fb_ref[...] + x.astype(jnp.float32))
    mean = jnp.mean(y, axis=-1, keepdims=True)
    var = jnp.mean((y - mean) ** 2, axis=-1, keepdims=True)
    inv = jax.lax.rsqrt(var + LN_EPS)
    o_ref[...] = ((y - mean) * inv * g_ref[...] + b_ref[...]).astype(o_ref.dtype)


def ffn_block(h, i_w, i_b, f_w, f_b, ln_g, ln_b):
    """h: (M, H) bf16 rows; one launch for the whole FFN sub-layer."""
    M, H = h.shape
    I = i_w.shape[1]
    tm = min(TM, M)
    return pl.pallas_call(
        _ffn_block_kernel,
        out_shape=jax.ShapeDtypeStruct((M, H), h.dtype),
        grid=(pl.cdiv(M, tm),),
        in_specs=[
            pl.BlockSpec((tm, H), lambda i: (i, 0)),
            pl.BlockSpec((H, I), lambda i: (0, 0)),
            pl.BlockSpec((1, I), lambda i: (0, 0)),
            pl.BlockSpec((I, H), lambda i: (0, 0)),
            pl.BlockSpec((1, H), lambda i: (0, 0)),
            pl.BlockSpec((1, H), lambda i: (0, 0)),
            pl.BlockSpec((1, H), lambda i: (0, 0)),
        ],
        out_specs=pl.BlockSpec((tm, H), lambda i: (i, 0)),
        compiler_params=pltpu.CompilerParams(dimension_semantics=("parallel",)),
    )(h, i_w, i_b.reshape(1, I), f_w, f_b.reshape(1, H),
      ln_g.reshape(1, H), ln_b.reshape(1, H))


def _layernorm_kernel(x_ref, g_ref, b_ref, o_ref):
    x = x_ref[...].astype(jnp.float32)
    mean = jnp.mean(x, axis=-1, keepdims=True)
    var = jnp.mean((x - mean) ** 2, axis=-1, keepdims=True)
    inv = jax.lax.rsqrt(var + LN_EPS)
    o_ref[...] = ((x - mean) * inv * g_ref[...] + b_ref[...]).astype(o_ref.dtype)


def layernorm(x, gamma, beta):
    M, H = x.shape
    tm = min(TM, M)
    return pl.pallas_call(
        _layernorm_kernel,
        out_shape=jax.ShapeDtypeStruct((M, H), x.dtype),
        grid=(pl.cdiv(M, tm),),
        in_specs=[
            pl.BlockSpec((tm, H), lambda i: (i, 0)),
            pl.BlockSpec((1, H), lambda i: (0, 0)),
            pl.BlockSpec((1, H), lambda i: (0, 0)),
        ],
        out_specs=pl.BlockSpec((tm, H), lambda i: (i, 0)),
        compiler_params=pltpu.CompilerParams(dimension_semantics=("parallel",)),
    )(x, gamma.reshape(1, H), beta.reshape(1, H))


def _pooler_classifier_kernel(cls_ref, pw_ref, pb_ref, cw_ref, cb_ref, o_ref):
    pooled = jnp.tanh(jnp.dot(cls_ref[...], pw_ref[...],
                              preferred_element_type=jnp.float32) + pb_ref[...])
    logits = jnp.dot(pooled, cw_ref[...],
                     preferred_element_type=jnp.float32) + cb_ref[...]
    o_ref[...] = logits.astype(o_ref.dtype)


def pooler_classifier(cls_tok, pool_w, pool_b, cls_w, cls_b):
    """Fused BERT pooler (tanh dense on [CLS]) + classifier head, one launch."""
    B, H = cls_tok.shape
    NC = cls_w.shape[1]
    vmem = pl.BlockSpec(memory_space=pltpu.MemorySpace.VMEM)
    return pl.pallas_call(
        _pooler_classifier_kernel,
        out_shape=jax.ShapeDtypeStruct((B, NC), jnp.float32),
        in_specs=[vmem, vmem, vmem, vmem, vmem],
        out_specs=vmem,
    )(cls_tok, pool_w, pool_b.reshape(1, H), cls_w, cls_b.reshape(1, NC))


# ----------------------------- parameters -----------------------------

def init_params(key):
    def nrm_f32(k, shape):
        return jax.random.normal(k, shape, jnp.float32) * 0.02

    def nrm(k, shape, dtype=ACT_DTYPE):
        return nrm_f32(k, shape).astype(dtype)

    keys = iter(jax.random.split(key, 8 + N_LAYERS * 8))
    params = {
        "word_emb": nrm(next(keys), (VOCAB, HIDDEN)),
        "pos_emb": nrm(next(keys), (MAX_POS, HIDDEN)),
        "type_emb": nrm(next(keys), (2, HIDDEN)),
        "emb_ln_g": jnp.ones((HIDDEN,), jnp.float32),
        "emb_ln_b": jnp.zeros((HIDDEN,), jnp.float32),
        # pooler/classifier are tiny -> keep f32
        "pool_w": nrm_f32(next(keys), (HIDDEN, HIDDEN)),
        "pool_b": jnp.zeros((HIDDEN,), jnp.float32),
        "cls_w": nrm_f32(next(keys), (HIDDEN, N_CLASSES)),
        "cls_b": jnp.zeros((N_CLASSES,), jnp.float32),
        "layers": [],
    }
    scale = 1.0 / math.sqrt(HEAD_DIM)
    for _l in range(N_LAYERS):
        # fused Q|K|V projection; fold 1/sqrt(Dh) into the Q columns (free at runtime)
        qkv_w = nrm_f32(next(keys), (HIDDEN, 3 * HIDDEN))
        qkv_w = qkv_w.at[:, :HIDDEN].multiply(scale)
        qkv_b = jnp.zeros((3 * HIDDEN,), jnp.float32)
        qkv_b = qkv_b.at[:HIDDEN].multiply(scale)
        layer = {
            "qkv_w": qkv_w.astype(ACT_DTYPE),
            "qkv_b": qkv_b,
            "o_w": nrm(next(keys), (HIDDEN, HIDDEN)),
            "o_b": jnp.zeros((HIDDEN,), jnp.float32),
            "attn_ln_g": jnp.ones((HIDDEN,), jnp.float32),
            "attn_ln_b": jnp.zeros((HIDDEN,), jnp.float32),
            "i_w": nrm(next(keys), (HIDDEN, INTERMEDIATE)),
            "i_b": jnp.zeros((INTERMEDIATE,), jnp.float32),
            "f_w": nrm(next(keys), (INTERMEDIATE, HIDDEN)),
            "f_b": jnp.zeros((HIDDEN,), jnp.float32),
            "ffn_ln_g": jnp.ones((HIDDEN,), jnp.float32),
            "ffn_ln_b": jnp.zeros((HIDDEN,), jnp.float32),
        }
        params["layers"].append(layer)
    return params


# ----------------------------- forward -----------------------------

def llama2_model_forward(params, input_ids, attention_mask):
    B, S = input_ids.shape
    pos_ids = jnp.arange(S)

    # embeddings (gathers are glue; kept in plain JAX)
    # TODO(synk): token_type_ids assumed all-zero (matches the reference call signature).
    emb = (params["word_emb"][input_ids]
           + params["pos_emb"][pos_ids][None, :, :]
           + params["type_emb"][0][None, None, :])
    h = layernorm(emb.reshape(B * S, HIDDEN).astype(ACT_DTYPE),
                  params["emb_ln_g"], params["emb_ln_b"])

    # HF-BERT additive attention mask: (1 - mask) * -10000, broadcast over query rows
    add_mask = (1.0 - attention_mask.astype(jnp.float32)) * -10000.0
    add_mask = add_mask.reshape(B, 1, S)

    for layer in params["layers"]:
        # --- fused attention block: QKV + MHSA + out-proj + residual + LN (1 launch) ---
        h3 = attention_block(h.reshape(B, S, HIDDEN), add_mask,
                             layer["qkv_w"], layer["qkv_b"],
                             layer["o_w"], layer["o_b"],
                             layer["attn_ln_g"], layer["attn_ln_b"])
        h = h3.reshape(B * S, HIDDEN)                        # free reshape (no transpose)

        # --- fused FFN block: up-proj + GELU + down-proj + residual + LN (1 launch) ---
        h = ffn_block(h, layer["i_w"], layer["i_b"], layer["f_w"], layer["f_b"],
                      layer["ffn_ln_g"], layer["ffn_ln_b"])

    hidden = h.reshape(B, S, HIDDEN)
    cls = hidden[:, 0, :].astype(jnp.float32)                # (B, HIDDEN)
    logits = pooler_classifier(cls, params["pool_w"], params["pool_b"],
                               params["cls_w"], params["cls_b"])  # self.classifier
    return logits


# ----------------------------- main -----------------------------

if __name__ == "__main__":
    key = jax.random.PRNGKey(0)
    pkey, ikey = jax.random.split(key)
    params = init_params(pkey)

    B, S = 2, 8
    input_ids = jax.random.randint(ikey, (B, S), 0, VOCAB, dtype=jnp.int32)
    attention_mask = jnp.array(
        [[1, 1, 1, 1, 1, 1, 1, 1],
         [1, 1, 1, 1, 1, 1, 0, 0]], dtype=jnp.int32)

    fwd = jax.jit(llama2_model_forward)
    logits = fwd(params, input_ids, attention_mask)
    jax.block_until_ready(logits)
    assert logits.shape == (B, N_CLASSES), logits.shape
    assert logits.dtype == jnp.float32
    print("KERNEL_OK")
</pallas_src>

<mosaic_0001>
module attributes {stable_mosaic.version = 11 : i64} {
  func.func @_layernorm_kernel(%arg0: i32, %arg1: memref<16x32xbf16, #tpu.memory_space<vmem>>, %arg2: memref<1x32xf32, #tpu.memory_space<vmem>>, %arg3: memref<1x32xf32, #tpu.memory_space<vmem>>, %arg4: memref<16x32xbf16, #tpu.memory_space<vmem>>) attributes {dimension_semantics = [#tpu.dimension_semantics<parallel>], iteration_bounds = array<i64: 1>, scalar_prefetch = 0 : i64, scratch_operands = 0 : i64, tpu.core_type = #tpu.core_type<tc>, window_params = [{transform_indices = @transform_0, window_bounds = array<i64: 16, 32>}, {pipeline_mode = #tpu.pipeline_mode<synchronous>, transform_indices = @transform_1, window_bounds = array<i64: 1, 32>}, {pipeline_mode = #tpu.pipeline_mode<synchronous>, transform_indices = @transform_2, window_bounds = array<i64: 1, 32>}, {transform_indices = @transform_3, window_bounds = array<i64: 16, 32>}]} {
    %c0 = arith.constant 0 : index
    %c0_0 = arith.constant 0 : index
    %0 = vector.load %arg1[%c0, %c0_0] : memref<16x32xbf16, #tpu.memory_space<vmem>>, vector<16x32xbf16>
    %1 = arith.extf %0 : vector<16x32xbf16> to vector<16x32xf32>
    %cst = arith.constant dense<0.000000e+00> : vector<16xf32>
    %2 = vector.multi_reduction <add>, %1, %cst [1] : vector<16x32xf32> to vector<16xf32>
    %3 = vector.shape_cast %2 : vector<16xf32> to vector<16x1xf32>
    %cst_1 = arith.constant 3.200000e+01 : f32
    %4 = vector.broadcast %cst_1 : f32 to vector<16x1xf32>
    %5 = arith.divf %3, %4 : vector<16x1xf32>
    %6 = vector.broadcast %5 : vector<16x1xf32> to vector<16x32xf32>
    %7 = arith.subf %1, %6 : vector<16x32xf32>
    %8 = arith.mulf %7, %7 : vector<16x32xf32>
    %cst_2 = arith.constant dense<0.000000e+00> : vector<16xf32>
    %9 = vector.multi_reduction <add>, %8, %cst_2 [1] : vector<16x32xf32> to vector<16xf32>
    %10 = vector.shape_cast %9 : vector<16xf32> to vector<16x1xf32>
    %cst_3 = arith.constant 3.200000e+01 : f32
    %11 = vector.broadcast %cst_3 : f32 to vector<16x1xf32>
    %12 = arith.divf %10, %11 : vector<16x1xf32>
    %cst_4 = arith.constant 9.99999996E-13 : f32
    %13 = vector.broadcast %cst_4 : f32 to vector<16x1xf32>
    %14 = arith.addf %12, %13 : vector<16x1xf32>
    %15 = math.rsqrt %14 : vector<16x1xf32>
    %16 = vector.broadcast %5 : vector<16x1xf32> to vector<16x32xf32>
    %17 = arith.subf %1, %16 : vector<16x32xf32>
    %18 = vector.broadcast %15 : vector<16x1xf32> to vector<16x32xf32>
    %19 = arith.mulf %17, %18 : vector<16x32xf32>
    %c0_5 = arith.constant 0 : index
    %c0_6 = arith.constant 0 : index
    %20 = vector.load %arg2[%c0_5, %c0_6] : memref<1x32xf32, #tpu.memory_space<vmem>>, vector<1x32xf32>
    %21 = vector.broadcast %20 : vector<1x32xf32> to vector<16x32xf32>
    %22 = arith.mulf %19, %21 : vector<16x32xf32>
    %c0_7 = arith.constant 0 : index
    %c0_8 = arith.constant 0 : index
    %23 = vector.load %arg3[%c0_7, %c0_8] : memref<1x32xf32, #tpu.memory_space<vmem>>, vector<1x32xf32>
    %24 = vector.broadcast %23 : vector<1x32xf32> to vector<16x32xf32>
    %25 = arith.addf %22, %24 : vector<16x32xf32>
    %26 = arith.truncf %25 : vector<16x32xf32> to vector<16x32xbf16>
    %c0_9 = arith.constant 0 : index
    %c0_10 = arith.constant 0 : index
    %27 = vector.load %arg4[%c0_9, %c0_10] : memref<16x32xbf16, #tpu.memory_space<vmem>>, vector<16x32xbf16>
    tpu.vector_store %arg4[%c0_9, %c0_10], %26 {strides = array<i32>} : memref<16x32xbf16, #tpu.memory_space<vmem>>, vector<16x32xbf16>,
    return
  }
  func.func @transform_0(%arg0: i32) -> (i32, i32) {
    %c0_i32 = arith.constant 0 : i32
    %c0_i32_0 = arith.constant 0 : i32
    return %arg0, %c0_i32 : i32, i32
  }
  func.func @transform_1(%arg0: i32) -> (i32, i32) {
    %c0_i32 = arith.constant 0 : i32
    %c0_i32_0 = arith.constant 0 : i32
    %c0_i32_1 = arith.constant 0 : i32
    return %c0_i32, %c0_i32_0 : i32, i32
  }
  func.func @transform_2(%arg0: i32) -> (i32, i32) {
    %c0_i32 = arith.constant 0 : i32
    %c0_i32_0 = arith.constant 0 : i32
    %c0_i32_1 = arith.constant 0 : i32
    return %c0_i32, %c0_i32_0 : i32, i32
  }
  func.func @transform_3(%arg0: i32) -> (i32, i32) {
    %c0_i32 = arith.constant 0 : i32
    %c0_i32_0 = arith.constant 0 : i32
    return %arg0, %c0_i32 : i32, i32
  }
}

module attributes {stable_mosaic.version = 11 : i64} {
  func.func @_ffn_block_kernel(%arg0: i32, %arg1: memref<16x32xbf16, #tpu.memory_space<vmem>>, %arg2: memref<32x64xbf16, #tpu.memory_space<vmem>>, %arg3: memref<1x64xf32, #tpu.memory_space<vmem>>, %arg4: memref<64x32xbf16, #tpu.memory_space<vmem>>, %arg5: memref<1x32xf32, #tpu.memory_space<vmem>>, %arg6: memref<1x32xf32, #tpu.memory_space<vmem>>, %arg7: memref<1x32xf32, #tpu.memory_space<vmem>>, %arg8: memref<16x32xbf16, #tpu.memory_space<vmem>>) attributes {dimension_semantics = [#tpu.dimension_semantics<parallel>], iteration_bounds = array<i64: 1>, scalar_prefetch = 0 : i64, scratch_operands = 0 : i64, tpu.core_type = #tpu.core_type<tc>, window_params = [{transform_indices = @transform_0, window_bounds = array<i64: 16, 32>}, {pipeline_mode = #tpu.pipeline_mode<synchronous>, transform_indices = @transform_1, window_bounds = array<i64: 32, 64>}, {pipeline_mode = #tpu.pipeline_mode<synchronous>, transform_indices = @transform_2, window_bounds = array<i64: 1, 64>}, {pipeline_mode = #tpu.pipeline_mode<synchronous>, transform_indices = @transform_3, window_bounds = array<i64: 64, 32>}, {pipeline_mode = #tpu.pipeline_mode<synchronous>, transform_indices = @transform_4, window_bounds = array<i64: 1, 32>}, {pipeline_mode = #tpu.pipeline_mode<synchronous>, transform_indices = @transform_5, window_bounds = array<i64: 1, 32>}, {pipeline_mode = #tpu.pipeline_mode<synchronous>, transform_indices = @transform_6, window_bounds = array<i64: 1, 32>}, {transform_indices = @transform_7, window_bounds = array<i64: 16, 32>}]} {
    %c0 = arith.constant 0 : index
    %c0_0 = arith.constant 0 : index
    %0 = vector.load %arg1[%c0, %c0_0] : memref<16x32xbf16, #tpu.memory_space<vmem>>, vector<16x32xbf16>
    %c0_1 = arith.constant 0 : index
    %c0_2 = arith.constant 0 : index
    %1 = vector.load %arg2[%c0_1, %c0_2] : memref<32x64xbf16, #tpu.memory_space<vmem>>, vector<32x64xbf16>
    %cst = arith.constant dense<0.000000e+00> : vector<16x64xf32>
    %2 = tpu.matmul %0, %1, %cst {dimension_numbers = #tpu.dot_dimension_numbers<[1], [0], [0], [1], [0, 0, 1, 1], [], []>} : vector<16x32xbf16>, vector<32x64xbf16>, vector<16x64xf32> -> vector<16x64xf32>
    %c0_3 = arith.constant 0 : index
    %c0_4 = arith.constant 0 : index
    %3 = vector.load %arg3[%c0_3, %c0_4] : memref<1x64xf32, #tpu.memory_space<vmem>>, vector<1x64xf32>
    %4 = vector.broadcast %3 : vector<1x64xf32> to vector<16x64xf32>
    %5 = arith.addf %2, %4 : vector<16x64xf32>
    %6 = arith.mulf %5, %5 : vector<16x64xf32>
    %7 = arith.mulf %5, %6 : vector<16x64xf32>
    %cst_5 = arith.constant 4.471500e-02 : f32
    %8 = vector.broadcast %cst_5 : f32 to vector<16x64xf32>
    %9 = arith.mulf %8, %7 : vector<16x64xf32>
    %10 = arith.addf %5, %9 : vector<16x64xf32>
    %cst_6 = arith.constant 0.797884583 : f32
    %11 = vector.broadcast %cst_6 : f32 to vector<16x64xf32>
    %12 = arith.mulf %11, %10 : vector<16x64xf32>
    %13 = math.tanh %12 : vector<16x64xf32>
    %cst_7 = arith.constant 1.000000e+00 : f32
    %14 = vector.broadcast %cst_7 : f32 to vector<16x64xf32>
    %15 = arith.addf %14, %13 : vector<16x64xf32>
    %cst_8 = arith.constant 5.000000e-01 : f32
    %16 = vector.broadcast %cst_8 : f32 to vector<16x64xf32>
    %17 = arith.mulf %16, %15 : vector<16x64xf32>
    %18 = arith.mulf %5, %17 : vector<16x64xf32>
    %19 = arith.truncf %18 : vector<16x64xf32> to vector<16x64xbf16>
    %c0_9 = arith.constant 0 : index
    %c0_10 = arith.constant 0 : index
    %20 = vector.load %arg4[%c0_9, %c0_10] : memref<64x32xbf16, #tpu.memory_space<vmem>>, vector<64x32xbf16>
    %cst_11 = arith.constant dense<0.000000e+00> : vector<16x32xf32>
    %21 = tpu.matmul %19, %20, %cst_11 {dimension_numbers = #tpu.dot_dimension_numbers<[1], [0], [0], [1], [0, 0, 1, 1], [], []>} : vector<16x64xbf16>, vector<64x32xbf16>, vector<16x32xf32> -> vector<16x32xf32>
    %c0_12 = arith.constant 0 : index
    %c0_13 = arith.constant 0 : index
    %22 = vector.load %arg5[%c0_12, %c0_13] : memref<1x32xf32, #tpu.memory_space<vmem>>, vector<1x32xf32>
    %23 = vector.broadcast %22 : vector<1x32xf32> to vector<16x32xf32>
    %24 = arith.addf %21, %23 : vector<16x32xf32>
    %25 = arith.extf %0 : vector<16x32xbf16> to vector<16x32xf32>
    %26 = arith.addf %24, %25 : vector<16x32xf32>
    %cst_14 = arith.constant dense<0.000000e+00> : vector<16xf32>
    %27 = vector.multi_reduction <add>, %26, %cst_14 [1] : vector<16x32xf32> to vector<16xf32>
    %28 = vector.shape_cast %27 : vector<16xf32> to vector<16x1xf32>
    %cst_15 = arith.constant 3.200000e+01 : f32
    %29 = vector.broadcast %cst_15 : f32 to vector<16x1xf32>
    %30 = arith.divf %28, %29 : vector<16x1xf32>
    %31 = vector.broadcast %30 : vector<16x1xf32> to vector<16x32xf32>
    %32 = arith.subf %26, %31 : vector<16x32xf32>
    %33 = arith.mulf %32, %32 : vector<16x32xf32>
    %cst_16 = arith.constant dense<0.000000e+00> : vector<16xf32>
    %34 = vector.multi_reduction <add>, %33, %cst_16 [1] : vector<16x32xf32> to vector<16xf32>
    %35 = vector.shape_cast %34 : vector<16xf32> to vector<16x1xf32>
    %cst_17 = arith.constant 3.200000e+01 : f32
    %36 = vector.broadcast %cst_17 : f32 to vector<16x1xf32>
    %37 = arith.divf %35, %36 : vector<16x1xf32>
    %cst_18 = arith.constant 9.99999996E-13 : f32
    %38 = vector.broadcast %cst_18 : f32 to vector<16x1xf32>
    %39 = arith.addf %37, %38 : vector<16x1xf32>
    %40 = math.rsqrt %39 : vector<16x1xf32>
    %41 = vector.broadcast %30 : vector<16x1xf32> to vector<16x32xf32>
    %42 = arith.subf %26, %41 : vector<16x32xf32>
    %43 = vector.broadcast %40 : vector<16x1xf32> to vector<16x32xf32>
    %44 = arith.mulf %42, %43 : vector<16x32xf32>
    %c0_19 = arith.constant 0 : index
    %c0_20 = arith.constant 0 : index
    %45 = vector.load %arg6[%c0_19, %c0_20] : memref<1x32xf32, #tpu.memory_space<vmem>>, vector<1x32xf32>
    %46 = vector.broadcast %45 : vector<1x32xf32> to vector<16x32xf32>
    %47 = arith.mulf %44, %46 : vector<16x32xf32>
    %c0_21 = arith.constant 0 : index
    %c0_22 = arith.constant 0 : index
    %48 = vector.load %arg7[%c0_21, %c0_22] : memref<1x32xf32, #tpu.memory_space<vmem>>, vector<1x32xf32>
    %49 = vector.broadcast %48 : vector<1x32xf32> to vector<16x32xf32>
    %50 = arith.addf %47, %49 : vector<16x32xf32>
    %51 = arith.truncf %50 : vector<16x32xf32> to vector<16x32xbf16>
    %c0_23 = arith.constant 0 : index
    %c0_24 = arith.constant 0 : index
    %52 = vector.load %arg8[%c0_23, %c0_24] : memref<16x32xbf16, #tpu.memory_space<vmem>>, vector<16x32xbf16>
    tpu.vector_store %arg8[%c0_23, %c0_24], %51 {strides = array<i32>} : memref<16x32xbf16, #tpu.memory_space<vmem>>, vector<16x32xbf16>,
    return
  }
  func.func @transform_0(%arg0: i32) -> (i32, i32) {
    %c0_i32 = arith.constant 0 : i32
    %c0_i32_0 = arith.constant 0 : i32
    return %arg0, %c0_i32 : i32, i32
  }
  func.func @transform_1(%arg0: i32) -> (i32, i32) {
    %c0_i32 = arith.constant 0 : i32
    %c0_i32_0 = arith.constant 0 : i32
    %c0_i32_1 = arith.constant 0 : i32
    return %c0_i32, %c0_i32_0 : i32, i32
  }
  func.func @transform_2(%arg0: i32) -> (i32, i32) {
    %c0_i32 = arith.constant 0 : i32
    %c0_i32_0 = arith.constant 0 : i32
    %c0_i32_1 = arith.constant 0 : i32
    return %c0_i32, %c0_i32_0 : i32, i32
  }
  func.func @transform_3(%arg0: i32) -> (i32, i32) {
    %c0_i32 = arith.constant 0 : i32
    %c0_i32_0 = arith.constant 0 : i32
    %c0_i32_1 = arith.constant 0 : i32
    return %c0_i32, %c0_i32_0 : i32, i32
  }
  func.func @transform_4(%arg0: i32) -> (i32, i32) {
    %c0_i32 = arith.constant 0 : i32
    %c0_i32_0 = arith.constant 0 : i32
    %c0_i32_1 = arith.constant 0 : i32
    return %c0_i32, %c0_i32_0 : i32, i32
  }
  func.func @transform_5(%arg0: i32) -> (i32, i32) {
    %c0_i32 = arith.constant 0 : i32
    %c0_i32_0 = arith.constant 0 : i32
    %c0_i32_1 = arith.constant 0 : i32
    return %c0_i32, %c0_i32_0 : i32, i32
  }
  func.func @transform_6(%arg0: i32) -> (i32, i32) {
    %c0_i32 = arith.constant 0 : i32
    %c0_i32_0 = arith.constant 0 : i32
    %c0_i32_1 = arith.constant 0 : i32
    return %c0_i32, %c0_i32_0 : i32, i32
  }
  func.func @transform_7(%arg0: i32) -> (i32, i32) {
    %c0_i32 = arith.constant 0 : i32
    %c0_i32_0 = arith.constant 0 : i32
    return %arg0, %c0_i32 : i32, i32
  }
}

module attributes {stable_mosaic.version = 11 : i64} {
  func.func @_attention_block_kernel(%arg0: i32, %arg1: memref<1x8x32xbf16, #tpu.memory_space<vmem>>, %arg2: memref<1x1x8xf32, #tpu.memory_space<vmem>>, %arg3: memref<32x96xbf16, #tpu.memory_space<vmem>>, %arg4: memref<1x96xf32, #tpu.memory_space<vmem>>, %arg5: memref<32x32xbf16, #tpu.memory_space<vmem>>, %arg6: memref<1x32xf32, #tpu.memory_space<vmem>>, %arg7: memref<1x32xf32, #tpu.memory_space<vmem>>, %arg8: memref<1x32xf32, #tpu.memory_space<vmem>>, %arg9: memref<1x8x32xbf16, #tpu.memory_space<vmem>>, %arg10: memref<8x32xbf16, #tpu.memory_space<vmem>>) attributes {dimension_semantics = [#tpu.dimension_semantics<parallel>], iteration_bounds = array<i64: 2>, scalar_prefetch = 0 : i64, scratch_operands = 1 : i64, tpu.core_type = #tpu.core_type<tc>, window_params = [{transform_indices = @transform_0, window_bounds = array<i64: 1, 8, 32>}, {transform_indices = @transform_1, window_bounds = array<i64: 1, 1, 8>}, {pipeline_mode = #tpu.pipeline_mode<synchronous>, transform_indices = @transform_2, window_bounds = array<i64: 32, 96>}, {pipeline_mode = #tpu.pipeline_mode<synchronous>, transform_indices = @transform_3, window_bounds = array<i64: 1, 96>}, {pipeline_mode = #tpu.pipeline_mode<synchronous>, transform_indices = @transform_4, window_bounds = array<i64: 32, 32>}, {pipeline_mode = #tpu.pipeline_mode<synchronous>, transform_indices = @transform_5, window_bounds = array<i64: 1, 32>}, {pipeline_mode = #tpu.pipeline_mode<synchronous>, transform_indices = @transform_6, window_bounds = array<i64: 1, 32>}, {pipeline_mode = #tpu.pipeline_mode<synchronous>, transform_indices = @transform_7, window_bounds = array<i64: 1, 32>}, {transform_indices = @transform_8, window_bounds = array<i64: 1, 8, 32>}]} {
    %c0 = arith.constant 0 : index
    %c0_0 = arith.constant 0 : index
    %c0_1 = arith.constant 0 : index
    %0 = vector.load %arg1[%c0, %c0_0, %c0_1] : memref<1x8x32xbf16, #tpu.memory_space<vmem>>, vector<1x8x32xbf16>
    %1 = vector.shape_cast %0 : vector<1x8x32xbf16> to vector<8x32xbf16>
    %c0_2 = arith.constant 0 : index
    %c0_3 = arith.constant 0 : index
    %c0_4 = arith.constant 0 : index
    %2 = vector.load %arg2[%c0_2, %c0_3, %c0_4] : memref<1x1x8xf32, #tpu.memory_space<vmem>>, vector<1x1x8xf32>
    %3 = vector.shape_cast %2 : vector<1x1x8xf32> to vector<1x8xf32>
    %c0_5 = arith.constant 0 : index
    %c0_6 = arith.constant 0 : index
    %4 = vector.load %arg3[%c0_5, %c0_6] : memref<32x96xbf16, #tpu.memory_space<vmem>>, vector<32x96xbf16>
    %cst = arith.constant dense<0.000000e+00> : vector<8x96xf32>
    %5 = tpu.matmul %1, %4, %cst {dimension_numbers = #tpu.dot_dimension_numbers<[1], [0], [0], [1], [0, 0, 1, 1], [], []>} : vector<8x32xbf16>, vector<32x96xbf16>, vector<8x96xf32> -> vector<8x96xf32>
    %c0_7 = arith.constant 0 : index
    %c0_8 = arith.constant 0 : index
    %6 = vector.load %arg4[%c0_7, %c0_8] : memref<1x96xf32, #tpu.memory_space<vmem>>, vector<1x96xf32>
    %7 = vector.broadcast %6 : vector<1x96xf32> to vector<8x96xf32>
    %8 = arith.addf %5, %7 : vector<8x96xf32>
    %9 = arith.truncf %8 : vector<8x96xf32> to vector<8x96xbf16>
    %10 = vector.extract_strided_slice %9 {offsets = [0, 0], sizes = [8, 8], strides = [1, 1]} : vector<8x96xbf16> to vector<8x8xbf16>
    %11 = vector.extract_strided_slice %9 {offsets = [0, 32], sizes = [8, 8], strides = [1, 1]} : vector<8x96xbf16> to vector<8x8xbf16>
    %12 = vector.extract_strided_slice %9 {offsets = [0, 64], sizes = [8, 8], strides = [1, 1]} : vector<8x96xbf16> to vector<8x8xbf16>
    %cst_9 = arith.constant dense<0.000000e+00> : vector<8x8xf32>
    %13 = tpu.matmul %10, %11, %cst_9 {dimension_numbers = #tpu.dot_dimension_numbers<[1], [1], [0], [0], [0, 0, 1, 0], [], []>} : vector<8x8xbf16>, vector<8x8xbf16>, vector<8x8xf32> -> vector<8x8xf32>
    %14 = vector.broadcast %3 : vector<1x8xf32> to vector<8x8xf32>
    %15 = arith.addf %13, %14 : vector<8x8xf32>
    %cst_10 = arith.constant dense<0xFF800000> : vector<8xf32>
    %16 = vector.multi_reduction <maximumf>, %15, %cst_10 [1] : vector<8x8xf32> to vector<8xf32>
    %17 = vector.shape_cast %16 : vector<8xf32> to vector<8x1xf32>
    %18 = vector.broadcast %17 : vector<8x1xf32> to vector<8x8xf32>
    %19 = arith.subf %15, %18 : vector<8x8xf32>
    %20 = math.exp %19 : vector<8x8xf32>
    %cst_11 = arith.constant dense<0.000000e+00> : vector<8xf32>
    %21 = vector.multi_reduction <add>, %20, %cst_11 [1] : vector<8x8xf32> to vector<8xf32>
    %22 = vector.shape_cast %21 : vector<8xf32> to vector<8x1xf32>
    %23 = tpu.reciprocal %22 {approx = true} : vector<8x1xf32> -> vector<8x1xf32>
    %24 = vector.broadcast %23 : vector<8x1xf32> to vector<8x8xf32>
    %25 = arith.mulf %20, %24 : vector<8x8xf32>
    %26 = arith.truncf %25 : vector<8x8xf32> to vector<8x8xbf16>
    %cst_12 = arith.constant dense<0.000000e+00> : vector<8x8xf32>
    %27 = tpu.matmul %26, %12, %cst_12 {dimension_numbers = #tpu.dot_dimension_numbers<[1], [0], [0], [1], [0, 0, 1, 1], [], []>} : vector<8x8xbf16>, vector<8x8xbf16>, vector<8x8xf32> -> vector<8x8xf32>
    %28 = arith.truncf %27 : vector<8x8xf32> to vector<8x8xbf16>
    %c0_13 = arith.constant 0 : index
    %c0_14 = arith.constant 0 : index
    %29 = vector.load %arg10[%c0_13, %c0_14] : memref<8x32xbf16, #tpu.memory_space<vmem>>, vector<8x8xbf16>
    tpu.vector_store %arg10[%c0_13, %c0_14], %28 {strides = array<i32>} : memref<8x32xbf16, #tpu.memory_space<vmem>>, vector<8x8xbf16>,
    %30 = vector.extract_strided_slice %9 {offsets = [0, 8], sizes = [8, 8], strides = [1, 1]} : vector<8x96xbf16> to vector<8x8xbf16>
    %31 = vector.extract_strided_slice %9 {offsets = [0, 40], sizes = [8, 8], strides = [1, 1]} : vector<8x96xbf16> to vector<8x8xbf16>
    %32 = vector.extract_strided_slice %9 {offsets = [0, 72], sizes = [8, 8], strides = [1, 1]} : vector<8x96xbf16> to vector<8x8xbf16>
    %cst_15 = arith.constant dense<0.000000e+00> : vector<8x8xf32>
    %33 = tpu.matmul %30, %31, %cst_15 {dimension_numbers = #tpu.dot_dimension_numbers<[1], [1], [0], [0], [0, 0, 1, 0], [], []>} : vector<8x8xbf16>, vector<8x8xbf16>, vector<8x8xf32> -> vector<8x8xf32>
    %34 = vector.broadcast %3 : vector<1x8xf32> to vector<8x8xf32>
    %35 = arith.addf %33, %34 : vector<8x8xf32>
    %cst_16 = arith.constant dense<0xFF800000> : vector<8xf32>
    %36 = vector.multi_reduction <maximumf>, %35, %cst_16 [1] : vector<8x8xf32> to vector<8xf32>
    %37 = vector.shape_cast %36 : vector<8xf32> to vector<8x1xf32>
    %38 = vector.broadcast %37 : vector<8x1xf32> to vector<8x8xf32>
    %39 = arith.subf %35, %38 : vector<8x8xf32>
    %40 = math.exp %39 : vector<8x8xf32>
    %cst_17 = arith.constant dense<0.000000e+00> : vector<8xf32>
    %41 = vector.multi_reduction <add>, %40, %cst_17 [1] : vector<8x8xf32> to vector<8xf32>
    %42 = vector.shape_cast %41 : vector<8xf32> to vector<8x1xf32>
    %43 = tpu.reciprocal %42 {approx = true} : vector<8x1xf32> -> vector<8x1xf32>
    %44 = vector.broadcast %43 : vector<8x1xf32> to vector<8x8xf32>
    %45 = arith.mulf %40, %44 : vector<8x8xf32>
    %46 = arith.truncf %45 : vector<8x8xf32> to vector<8x8xbf16>
    %cst_18 = arith.constant dense<0.000000e+00> : vector<8x8xf32>
    %47 = tpu.matmul %46, %32, %cst_18 {dimension_numbers = #tpu.dot_dimension_numbers<[1], [0], [0], [1], [0, 0, 1, 1], [], []>} : vector<8x8xbf16>, vector<8x8xbf16>, vector<8x8xf32> -> vector<8x8xf32>
    %48 = arith.truncf %47 : vector<8x8xf32> to vector<8x8xbf16>
    %c0_19 = arith.constant 0 : index
    %c8 = arith.constant 8 : index
    %49 = vector.load %arg10[%c0_19, %c8] : memref<8x32xbf16, #tpu.memory_space<vmem>>, vector<8x8xbf16>
    tpu.vector_store %arg10[%c0_19, %c8], %48 {strides = array<i32>} : memref<8x32xbf16, #tpu.memory_space<vmem>>, vector<8x8xbf16>,
    %50 = vector.extract_strided_slice %9 {offsets = [0, 16], sizes = [8, 8], strides = [1, 1]} : vector<8x96xbf16> to vector<8x8xbf16>
    %51 = vector.extract_strided_slice %9 {offsets = [0, 48], sizes = [8, 8], strides = [1, 1]} : vector<8x96xbf16> to vector<8x8xbf16>
    %52 = vector.extract_strided_slice %9 {offsets = [0, 80], sizes = [8, 8], strides = [1, 1]} : vector<8x96xbf16> to vector<8x8xbf16>
    %cst_20 = arith.constant dense<0.000000e+00> : vector<8x8xf32>
    %53 = tpu.matmul %50, %51, %cst_20 {dimension_numbers = #tpu.dot_dimension_numbers<[1], [1], [0], [0], [0, 0, 1, 0], [], []>} : vector<8x8xbf16>, vector<8x8xbf16>, vector<8x8xf32> -> vector<8x8xf32>
    %54 = vector.broadcast %3 : vector<1x8xf32> to vector<8x8xf32>
    %55 = arith.addf %53, %54 : vector<8x8xf32>
    %cst_21 = arith.constant dense<0xFF800000> : vector<8xf32>
    %56 = vector.multi_reduction <maximumf>, %55, %cst_21 [1] : vector<8x8xf32> to vector<8xf32>
    %57 = vector.shape_cast %56 : vector<8xf32> to vector<8x1xf32>
    %58 = vector.broadcast %57 : vector<8x1xf32> to vector<8x8xf32>
    %59 = arith.subf %55, %58 : vector<8x8xf32>
    %60 = math.exp %59 : vector<8x8xf32>
    %cst_22 = arith.constant dense<0.000000e+00> : vector<8xf32>
    %61 = vector.multi_reduction <add>, %60, %cst_22 [1] : vector<8x8xf32> to vector<8xf32>
    %62 = vector.shape_cast %61 : vector<8xf32> to vector<8x1xf32>
    %63 = tpu.reciprocal %62 {approx = true} : vector<8x1xf32> -> vector<8x1xf32>
    %64 = vector.broadcast %63 : vector<8x1xf32> to vector<8x8xf32>
    %65 = arith.mulf %60, %64 : vector<8x8xf32>
    %66 = arith.truncf %65 : vector<8x8xf32> to vector<8x8xbf16>
    %cst_23 = arith.constant dense<0.000000e+00> : vector<8x8xf32>
    %67 = tpu.matmul %66, %52, %cst_23 {dimension_numbers = #tpu.dot_dimension_numbers<[1], [0], [0], [1], [0, 0, 1, 1], [], []>} : vector<8x8xbf16>, vector<8x8xbf16>, vector<8x8xf32> -> vector<8x8xf32>
    %68 = arith.truncf %67 : vector<8x8xf32> to vector<8x8xbf16>
    %c0_24 = arith.constant 0 : index
    %c16 = arith.constant 16 : index
    %69 = vector.load %arg10[%c0_24, %c16] : memref<8x32xbf16, #tpu.memory_space<vmem>>, vector<8x8xbf16>
    tpu.vector_store %arg10[%c0_24, %c16], %68 {strides = array<i32>} : memref<8x32xbf16, #tpu.memory_space<vmem>>, vector<8x8xbf16>,
    %70 = vector.extract_strided_slice %9 {offsets = [0, 24], sizes = [8, 8], strides = [1, 1]} : vector<8x96xbf16> to vector<8x8xbf16>
    %71 = vector.extract_strided_slice %9 {offsets = [0, 56], sizes = [8, 8], strides = [1, 1]} : vector<8x96xbf16> to vector<8x8xbf16>
    %72 = vector.extract_strided_slice %9 {offsets = [0, 88], sizes = [8, 8], strides = [1, 1]} : vector<8x96xbf16> to vector<8x8xbf16>
    %cst_25 = arith.constant dense<0.000000e+00> : vector<8x8xf32>
    %73 = tpu.matmul %70, %71, %cst_25 {dimension_numbers = #tpu.dot_dimension_numbers<[1], [1], [0], [0], [0, 0, 1, 0], [], []>} : vector<8x8xbf16>, vector<8x8xbf16>, vector<8x8xf32> -> vector<8x8xf32>
    %74 = vector.broadcast %3 : vector<1x8xf32> to vector<8x8xf32>
    %75 = arith.addf %73, %74 : vector<8x8xf32>
    %cst_26 = arith.constant dense<0xFF800000> : vector<8xf32>
    %76 = vector.multi_reduction <maximumf>, %75, %cst_26 [1] : vector<8x8xf32> to vector<8xf32>
    %77 = vector.shape_cast %76 : vector<8xf32> to vector<8x1xf32>
    %78 = vector.broadcast %77 : vector<8x1xf32> to vector<8x8xf32>
    %79 = arith.subf %75, %78 : vector<8x8xf32>
    %80 = math.exp %79 : vector<8x8xf32>
    %cst_27 = arith.constant dense<0.000000e+00> : vector<8xf32>
    %81 = vector.multi_reduction <add>, %80, %cst_27 [1] : vector<8x8xf32> to vector<8xf32>
    %82 = vector.shape_cast %81 : vector<8xf32> to vector<8x1xf32>
    %83 = tpu.reciprocal %82 {approx = true} : vector<8x1xf32> -> vector<8x1xf32>
    %84 = vector.broadcast %83 : vector<8x1xf32> to vector<8x8xf32>
    %85 = arith.mulf %80, %84 : vector<8x8xf32>
    %86 = arith.truncf %85 : vector<8x8xf32> to vector<8x8xbf16>
    %cst_28 = arith.constant dense<0.000000e+00> : vector<8x8xf32>
    %87 = tpu.matmul %86, %72, %cst_28 {dimension_numbers = #tpu.dot_dimension_numbers<[1], [0], [0], [1], [0, 0, 1, 1], [], []>} : vector<8x8xbf16>, vector<8x8xbf16>, vector<8x8xf32> -> vector<8x8xf32>
    %88 = arith.truncf %87 : vector<8x8xf32> to vector<8x8xbf16>
    %c0_29 = arith.constant 0 : index
    %c24 = arith.constant 24 : index
    %89 = vector.load %arg10[%c0_29, %c24] : memref<8x32xbf16, #tpu.memory_space<vmem>>, vector<8x8xbf16>
    tpu.vector_store %arg10[%c0_29, %c24], %88 {strides = array<i32>} : memref<8x32xbf16, #tpu.memory_space<vmem>>, vector<8x8xbf16>,
    %c0_30 = arith.constant 0 : index
    %c0_31 = arith.constant 0 : index
    %90 = vector.load %arg10[%c0_30, %c0_31] : memref<8x32xbf16, #tpu.memory_space<vmem>>, vector<8x32xbf16>
    %c0_32 = arith.constant 0 : index
    %c0_33 = arith.constant 0 : index
    %91 = vector.load %arg5[%c0_32, %c0_33] : memref<32x32xbf16, #tpu.memory_space<vmem>>, vector<32x32xbf16>
    %cst_34 = arith.constant dense<0.000000e+00> : vector<8x32xf32>
    %92 = tpu.matmul %90, %91, %cst_34 {dimension_numbers = #tpu.dot_dimension_numbers<[1], [0], [0], [1], [0, 0, 1, 1], [], []>} : vector<8x32xbf16>, vector<32x32xbf16>, vector<8x32xf32> -> vector<8x32xf32>
    %c0_35 = arith.constant 0 : index
    %c0_36 = arith.constant 0 : index
    %93 = vector.load %arg6[%c0_35, %c0_36] : memref<1x32xf32, #tpu.memory_space<vmem>>, vector<1x32xf32>
    %94 = vector.broadcast %93 : vector<1x32xf32> to vector<8x32xf32>
    %95 = arith.addf %92, %94 : vector<8x32xf32>
    %96 = arith.extf %1 : vector<8x32xbf16> to vector<8x32xf32>
    %97 = arith.addf %95, %96 : vector<8x32xf32>
    %cst_37 = arith.constant dense<0.000000e+00> : vector<8xf32>
    %98 = vector.multi_reduction <add>, %97, %cst_37 [1] : vector<8x32xf32> to vector<8xf32>
    %99 = vector.shape_cast %98 : vector<8xf32> to vector<8x1xf32>
    %cst_38 = arith.constant 3.200000e+01 : f32
    %100 = vector.broadcast %cst_38 : f32 to vector<8x1xf32>
    %101 = arith.divf %99, %100 : vector<8x1xf32>
    %102 = vector.broadcast %101 : vector<8x1xf32> to vector<8x32xf32>
    %103 = arith.subf %97, %102 : vector<8x32xf32>
    %104 = arith.mulf %103, %103 : vector<8x32xf32>
    %cst_39 = arith.constant dense<0.000000e+00> : vector<8xf32>
    %105 = vector.multi_reduction <add>, %104, %cst_39 [1] : vector<8x32xf32> to vector<8xf32>
    %106 = vector.shape_cast %105 : vector<8xf32> to vector<8x1xf32>
    %cst_40 = arith.constant 3.200000e+01 : f32
    %107 = vector.broadcast %cst_40 : f32 to vector<8x1xf32>
    %108 = arith.divf %106, %107 : vector<8x1xf32>
    %cst_41 = arith.constant 9.99999996E-13 : f32
    %109 = vector.broadcast %cst_41 : f32 to vector<8x1xf32>
    %110 = arith.addf %108, %109 : vector<8x1xf32>
    %111 = math.rsqrt %110 : vector<8x1xf32>
    %112 = vector.broadcast %101 : vector<8x1xf32> to vector<8x32xf32>
    %113 = arith.subf %97, %112 : vector<8x32xf32>
    %114 = vector.broadcast %111 : vector<8x1xf32> to vector<8x32xf32>
    %115 = arith.mulf %113, %114 : vector<8x32xf32>
    %c0_42 = arith.constant 0 : index
    %c0_43 = arith.constant 0 : index
    %116 = vector.load %arg7[%c0_42, %c0_43] : memref<1x32xf32, #tpu.memory_space<vmem>>, vector<1x32xf32>
    %117 = vector.broadcast %116 : vector<1x32xf32> to vector<8x32xf32>
    %118 = arith.mulf %115, %117 : vector<8x32xf32>
    %c0_44 = arith.constant 0 : index
    %c0_45 = arith.constant 0 : index
    %119 = vector.load %arg8[%c0_44, %c0_45] : memref<1x32xf32, #tpu.memory_space<vmem>>, vector<1x32xf32>
    %120 = vector.broadcast %119 : vector<1x32xf32> to vector<8x32xf32>
    %121 = arith.addf %118, %120 : vector<8x32xf32>
    %122 = arith.truncf %121 : vector<8x32xf32> to vector<8x32xbf16>
    %c0_46 = arith.constant 0 : index
    %c0_47 = arith.constant 0 : index
    %c0_48 = arith.constant 0 : index
    %123 = vector.load %arg9[%c0_46, %c0_47, %c0_48] : memref<1x8x32xbf16, #tpu.memory_space<vmem>>, vector<1x8x32xbf16>
    %124 = vector.shape_cast %123 : vector<1x8x32xbf16> to vector<8x32xbf16>
    %125 = vector.shape_cast %122 : vector<8x32xbf16> to vector<1x8x32xbf16>
    tpu.vector_store %arg9[%c0_46, %c0_47, %c0_48], %125 {strides = array<i32>} : memref<1x8x32xbf16, #tpu.memory_space<vmem>>, vector<1x8x32xbf16>,
    return
  }
  func.func @transform_0(%arg0: i32) -> (i32, i32, i32) {
    %c0_i32 = arith.constant 0 : i32
    %c0_i32_0 = arith.constant 0 : i32
    %c0_i32_1 = arith.constant 0 : i32
    return %arg0, %c0_i32, %c0_i32_0 : i32, i32, i32
  }
  func.func @transform_1(%arg0: i32) -> (i32, i32, i32) {
    %c0_i32 = arith.constant 0 : i32
    %c0_i32_0 = arith.constant 0 : i32
    %c0_i32_1 = arith.constant 0 : i32
    return %arg0, %c0_i32, %c0_i32_0 : i32, i32, i32
  }
  func.func @transform_2(%arg0: i32) -> (i32, i32) {
    %c0_i32 = arith.constant 0 : i32
    %c0_i32_0 = arith.constant 0 : i32
    %c0_i32_1 = arith.constant 0 : i32
    return %c0_i32, %c0_i32_0 : i32, i32
  }
  func.func @transform_3(%arg0: i32) -> (i32, i32) {
    %c0_i32 = arith.constant 0 : i32
    %c0_i32_0 = arith.constant 0 : i32
    %c0_i32_1 = arith.constant 0 : i32
    return %c0_i32, %c0_i32_0 : i32, i32
  }
  func.func @transform_4(%arg0: i32) -> (i32, i32) {
    %c0_i32 = arith.constant 0 : i32
    %c0_i32_0 = arith.constant 0 : i32
    %c0_i32_1 = arith.constant 0 : i32
    return %c0_i32, %c0_i32_0 : i32, i32
  }
  func.func @transform_5(%arg0: i32) -> (i32, i32) {
    %c0_i32 = arith.constant 0 : i32
    %c0_i32_0 = arith.constant 0 : i32
    %c0_i32_1 = arith.constant 0 : i32
    return %c0_i32, %c0_i32_0 : i32, i32
  }
  func.func @transform_6(%arg0: i32) -> (i32, i32) {
    %c0_i32 = arith.constant 0 : i32
    %c0_i32_0 = arith.constant 0 : i32
    %c0_i32_1 = arith.constant 0 : i32
    return %c0_i32, %c0_i32_0 : i32, i32
  }
  func.func @transform_7(%arg0: i32) -> (i32, i32) {
    %c0_i32 = arith.constant 0 : i32
    %c0_i32_0 = arith.constant 0 : i32
    %c0_i32_1 = arith.constant 0 : i32
    return %c0_i32, %c0_i32_0 : i32, i32
  }
  func.func @transform_8(%arg0: i32) -> (i32, i32, i32) {
    %c0_i32 = arith.constant 0 : i32
    %c0_i32_0 = arith.constant 0 : i32
    %c0_i32_1 = arith.constant 0 : i32
    return %arg0, %c0_i32, %c0_i32_0 : i32, i32, i32
  }
}

module attributes {stable_mosaic.version = 11 : i64} {
  func.func @_pooler_classifier_kernel(%arg0: memref<2x32xf32, #tpu.memory_space<vmem>>, %arg1: memref<32x32xf32, #tpu.memory_space<vmem>>, %arg2: memref<1x32xf32, #tpu.memory_space<vmem>>, %arg3: memref<32x3xf32, #tpu.memory_space<vmem>>, %arg4: memref<1x3xf32, #tpu.memory_space<vmem>>, %arg5: memref<2x3xf32, #tpu.memory_space<vmem>>) attributes {dimension_semantics = [], scalar_prefetch = 0 : i64, scratch_operands = 0 : i64, tpu.core_type = #tpu.core_type<tc>} {
    %c0 = arith.constant 0 : index
    %c0_0 = arith.constant 0 : index
    %0 = vector.load %arg0[%c0, %c0_0] : memref<2x32xf32, #tpu.memory_space<vmem>>, vector<2x32xf32>
    %c0_1 = arith.constant 0 : index
    %c0_2 = arith.constant 0 : index
    %1 = vector.load %arg1[%c0_1, %c0_2] : memref<32x32xf32, #tpu.memory_space<vmem>>, vector<32x32xf32>
    %cst = arith.constant dense<0.000000e+00> : vector<2x32xf32>
    %2 = tpu.matmul %0, %1, %cst {dimension_numbers = #tpu.dot_dimension_numbers<[1], [0], [0], [1], [0, 0, 1, 1], [], []>} : vector<2x32xf32>, vector<32x32xf32>, vector<2x32xf32> -> vector<2x32xf32>
    %c0_3 = arith.constant 0 : index
    %c0_4 = arith.constant 0 : index
    %3 = vector.load %arg2[%c0_3, %c0_4] : memref<1x32xf32, #tpu.memory_space<vmem>>, vector<1x32xf32>
    %4 = vector.broadcast %3 : vector<1x32xf32> to vector<2x32xf32>
    %5 = arith.addf %2, %4 : vector<2x32xf32>
    %6 = math.tanh %5 : vector<2x32xf32>
    %c0_5 = arith.constant 0 : index
    %c0_6 = arith.constant 0 : index
    %7 = vector.load %arg3[%c0_5, %c0_6] : memref<32x3xf32, #tpu.memory_space<vmem>>, vector<32x3xf32>
    %cst_7 = arith.constant dense<0.000000e+00> : vector<2x3xf32>
    %8 = tpu.matmul %6, %7, %cst_7 {dimension_numbers = #tpu.dot_dimension_numbers<[1], [0], [0], [1], [0, 0, 1, 1], [], []>} : vector<2x32xf32>, vector<32x3xf32>, vector<2x3xf32> -> vector<2x3xf32>
    %c0_8 = arith.constant 0 : index
    %c0_9 = arith.constant 0 : index
    %9 = vector.load %arg4[%c0_8, %c0_9] : memref<1x3xf32, #tpu.memory_space<vmem>>, vector<1x3xf32>
    %10 = vector.broadcast %9 : vector<1x3xf32> to vector<2x3xf32>
    %11 = arith.addf %8, %10 : vector<2x3xf32>
    %c0_10 = arith.constant 0 : index
    %c0_11 = arith.constant 0 : index
    %12 = vector.load %arg5[%c0_10, %c0_11] : memref<2x3xf32, #tpu.memory_space<vmem>>, vector<2x3xf32>
    tpu.vector_store %arg5[%c0_10, %c0_11], %11 {strides = array<i32>} : memref<2x3xf32, #tpu.memory_space<vmem>>, vector<2x3xf32>,
    return
  }
}

</mosaic_0001>

<llo_original>
// kernel: llama2_model_forward.11
$region0: #{llama2_model_forward.11}
  #allocation0 [shape = 'u32[]', space=smem, size = 0x4, offset = 0x4, fixed_abs, tag = 'smem constant byte address 0x4 - core index']
  #allocation1 [shape = 'u32[72,128]{1,0:T(1,128)}', space=vmem, size = 0x9000, scoped, tag = 'internal scratch']
  %s0 = inlined_call_operand.vmem [shape: f32[2,32], index: 0, kind: input, shape index: {}]
  %s1 = inlined_call_operand.vmem [shape: f32[32,32], index: 1, kind: input, shape index: {}]
  %s2 = inlined_call_operand.vmem [shape: f32[1,32], index: 2, kind: input, shape index: {}]
  %s3 = inlined_call_operand.vmem [shape: f32[32,3], index: 3, kind: input, shape index: {}]
  %s4 = inlined_call_operand.vmem [shape: f32[1,3], index: 4, kind: input, shape index: {}]
  %s5 = inlined_call_operand.hbm [shape: f32[2,3], index: 5, kind: output, shape index: {}]
  %s6 = sld [smem:[#allocation0]]
  $region30: #{llama2_model_forward.11} parent=0
    _
  %s8 = ssub.s32 1, %s6
  %s9 = scalar_select 0, %s8, %s6
  $region1: #{llama2_model_forward.11} parent=0
    #allocation2 [shape = 'u8[1024]{0}', space=vmem, size = 0x400, scoped, tag = 'output window, operand 0, single buffered']
    #allocation3 [shape = 's32[1]{0}', space=sflag, size = 0x4, scoped, tag = 'scoped memory for llama2_model_forward.11']
    %10 = vsyncpa [#allocation3], 0
    // Predicated region
    $region2: #{llama2_model_forward.11} parent=1 // pred_check
      _
    $region3: #{llama2_model_forward.11} parent=1 // pred_check_branch
      %12 = sbr.rel (0) target = $region5
    $region4: #{llama2_model_forward.11} parent=1 // pred_region
      _
    $region5: #{llama2_model_forward.11} parent=1 // pred_fallthru
      _
    // Predicated region
    $region6: #{llama2_model_forward.11} parent=1 // pred_check
      _
    $region7: #{llama2_model_forward.11} parent=1 // pred_check_branch
      %14 = sbr.rel (0) target = $region9
    $region8: #{llama2_model_forward.11} parent=1 // pred_region
      _
    $region9: #{llama2_model_forward.11} parent=1 // pred_fallthru
      _
    // Predicated region
    $region10: #{llama2_model_forward.11} parent=1 // pred_check
      _
    $region11: #{llama2_model_forward.11} parent=1 // pred_check_branch
      %16 = sbr.rel (0) target = $region13
    $region12: #{llama2_model_forward.11} parent=1 // pred_region
      _
    $region13: #{llama2_model_forward.11} parent=1 // pred_fallthru
      _
    // Predicated region
    $region14: #{llama2_model_forward.11} parent=1 // pred_check
      _
    $region15: #{llama2_model_forward.11} parent=1 // pred_check_branch
      %18 = sbr.rel (0) target = $region17
    $region16: #{llama2_model_forward.11} parent=1 // pred_region
      _
    $region17: #{llama2_model_forward.11} parent=1 // pred_fallthru
      _
    // Predicated region
    $region18: #{llama2_model_forward.11} parent=1 // pred_check
      _
    $region19: #{llama2_model_forward.11} parent=1 // pred_check_branch
      %20 = sbr.rel (0) target = $region21
    $region20: #{llama2_model_forward.11} parent=1 // pred_region
      _
    $region21: #{llama2_model_forward.11} parent=1 // pred_fallthru
      _
    %v21 = vld [vmem:[%s0] sm:$0x3]
    %v22 = vld [vmem:[%s1] sm:$0xff]
    %v23 = vld [vmem:[%s1 + $0x8] sm:$0xff]
    %v24 = vld [vmem:[%s1 + $0x10] sm:$0xff]
    %v25 = vld [vmem:[%s1 + $0x18] sm:$0xff]
    %v26 = vld [vmem:[%s2] sm:$0x1]
    %v28 = vperm.slane %v26, 0
    %vm30 = vcmask 261120
    %v32 = vsel %vm30, %v21, 0
    %34 = vmatpush.msra.mxu0 0.0
    %35 = vmatpush.msra.mxu0 0.0
    %36 = vmatpush.msra.mxu0 0.0
    %37 = vmatpush.msra.mxu0 0.0
    %38 = vmatpush.msra.mxu0 0.0
    %39 = vmatpush.msra.mxu0 0.0
    %40 = vmatpush.msra.mxu0 0.0
    %41 = vmatpush.msra.mxu0 0.0
    %42 = vmatpush.msra.mxu0 0.0
    %43 = vmatpush.msra.mxu0 0.0
    %44 = vmatpush.msra.mxu0 0.0
    %45 = vmatpush.msra.mxu0 0.0
    %46 = vmatpush.msra.mxu0 %v25
    %47 = vmatpush.msra.mxu0 %v24
    %48 = vmatpush.msra.mxu0 %v23
    %49 = vmatpush.msra.mxu0 %v22
    %50 = vmatmul.f32.gmra.mxu0 %v32
    %v51 = vpop.f32.mrf.mxu0
    %v52 = vadd.f32 %v28, %v51
    %53 = vdwg.mxu0
    %v54 = vtanh.pop %v52
    %v55 = vld [vmem:[%s3] sm:$0xff]
    %v56 = vld [vmem:[%s3 + $0x8] sm:$0xff]
    %v57 = vld [vmem:[%s3 + $0x10] sm:$0xff]
    %v58 = vld [vmem:[%s3 + $0x18] sm:$0xff]
    %v59 = vld [vmem:[%s4] sm:$0x1]
    %v61 = vperm.slane %v59, 0
    %v64 = vsel %vm30, %v54, 0
    %66 = vmatpush.msra.mxu0 0.0
    %67 = vmatpush.msra.mxu0 0.0
    %68 = vmatpush.msra.mxu0 0.0
    %69 = vmatpush.msra.mxu0 0.0
    %70 = vmatpush.msra.mxu0 0.0
    %71 = vmatpush.msra.mxu0 0.0
    %72 = vmatpush.msra.mxu0 0.0
    %73 = vmatpush.msra.mxu0 0.0
    %74 = vmatpush.msra.mxu0 0.0
    %75 = vmatpush.msra.mxu0 0.0
    %76 = vmatpush.msra.mxu0 0.0
    %77 = vmatpush.msra.mxu0 0.0
    %78 = vmatpush.msra.mxu0 %v58
    %79 = vmatpush.msra.mxu0 %v57
    %80 = vmatpush.msra.mxu0 %v56
    %81 = vmatpush.msra.mxu0 %v55
    %82 = vmatmul.f32.gmra.mxu0 %v64
    %v83 = vpop.f32.mrf.mxu0
    %v84 = vadd.f32 %v61, %v83
    %85 = vdwg.mxu0
    %vm86 = vcmask 17408
    %87 = vst.msk [vmem:[#allocation2] sm:$0x3] %vm86, %v84
    // Predicated region
    $region22: #{llama2_model_forward.11} parent=1 // pred_check
      _
    $region23: #{llama2_model_forward.11} parent=1 // pred_check_branch
      %89 = sbr.rel (0) target = $region25
    $region24: #{llama2_model_forward.11} parent=1 // pred_region
      %91 = vsyncadd [#allocation3], 0
      %s93 = sshll.u32 [#allocation2], 4
      %s94 = int_to_ptr.vmem [resolvable:$true] %s93
      %s95 = sshll.u32 %s5, 4
      %s96 = int_to_ptr.hbm [resolvable:$true] %s95
      %98 = dma.vmem_to_hbm [thread:$0]  %s94, 32, %s96, [#allocation3]
    $region25: #{llama2_model_forward.11} parent=1 // pred_fallthru
      _
    // Predicated region
    $region26: #{llama2_model_forward.11} parent=1 // pred_check
      _
    $region27: #{llama2_model_forward.11} parent=1 // pred_check_branch
      %100 = sbr.rel (0) target = $region29
    $region28: #{llama2_model_forward.11} parent=1 // pred_region
      %102 = dma.done [#allocation3], 32
    $region29: #{llama2_model_forward.11} parent=1 // pred_fallthru
      _
    %103 = vsyncpa [#allocation3], 1

// kernel: llama2_model_forward.6
$region0: #{llama2_model_forward.6}
  #allocation0 [shape = 'u32[]', space=smem, size = 0x4, offset = 0x4, fixed_abs, tag = 'smem constant byte address 0x4 - core index']
  #allocation1 [shape = 'u32[72,128]{1,0:T(1,128)}', space=vmem, size = 0x9000, scoped, tag = 'internal scratch']
  %s0 = inlined_call_operand.vmem [shape: bf16[16,32], index: 0, kind: input, shape index: {}]
  %s1 = inlined_call_operand.vmem [shape: f32[1,32], index: 1, kind: input, shape index: {}]
  %s2 = inlined_call_operand.vmem [shape: f32[1,32], index: 2, kind: input, shape index: {}]
  %s3 = inlined_call_operand.vmem [shape: bf16[16,32], index: 3, kind: output, shape index: {}]
  %s4 = sld [smem:[#allocation0]]
  $region22: #{llama2_model_forward.6} parent=0
    _
  %s6 = ssub.s32 1, %s4
  %s7 = scalar_select 0, %s6, %s4
  // Predicated region
  $region2: #{llama2_model_forward.6} parent=0 // pred_check
    _
  $region3: #{llama2_model_forward.6} parent=0 // pred_check_branch
    %9 = sbr.rel (0) target = $region5
  $region4: #{llama2_model_forward.6} parent=0 // pred_region
    _
  $region5: #{llama2_model_forward.6} parent=0 // pred_fallthru
    _
  // Predicated region
  $region6: #{llama2_model_forward.6} parent=0 // pred_check
    _
  $region7: #{llama2_model_forward.6} parent=0 // pred_check_branch
    %11 = sbr.rel (0) target = $region9
  $region8: #{llama2_model_forward.6} parent=0 // pred_region
    _
  $region9: #{llama2_model_forward.6} parent=0 // pred_fallthru
    _
  // Predicated region
  $region10: #{llama2_model_forward.6} parent=0 // pred_check
    _
  $region11: #{llama2_model_forward.6} parent=0 // pred_check_branch
    %13 = sbr.rel (0) target = $region13
  $region12: #{llama2_model_forward.6} parent=0 // pred_region
    _
  $region13: #{llama2_model_forward.6} parent=0 // pred_fallthru
    _
  %v14 = vld [vmem:[%s0] sm:$0xf]
  %v15 = vld [vmem:[%s0 + $0x4] sm:$0xf]
  %v16 = vunpack.c.l.bf16 %v14
  %v17 = vunpack.c.l.bf16 %v15
  %vm18 = vcmask 261120
  %v19 = vsel %vm18, %v16, 0.0
  %20 = vadd.xlane.f32.xlu0 %v19
  %v21 = vpop.xlane.xlu0 %20
  %v22 = vsel %vm18, %v17, 0.0
  %23 = vadd.xlane.f32.xlu0 %v22
  %v24 = vpop.xlane.xlu0 %23
  %v25 = vrcp.pop 32.0
  %v26 = vmul.f32 32.0, %v25
  %v27 = vsub.f32 1.0, %v26
  %v28 = vmul.f32 %v25, %v27
  %v29 = vadd.f32 %v25, %v28
  %vm30 = vweird.f32 %v25
  %v31 = vsel %vm30, %v25, %v29
  %v32 = vmul.f32 %v21, %v31
  %v33 = vmul.f32 %v24, %v31
  %v34 = vsub.f32 %v16, %v32
  %v35 = vsub.f32 %v17, %v33
  %v36 = vmul.f32 %v34, %v34
  %v37 = vmul.f32 %v35, %v35
  %v38 = vsel %vm18, %v36, 0.0
  %39 = vadd.xlane.f32.xlu0 %v38
  %v40 = vpop.xlane.xlu0 %39
  %v41 = vsel %vm18, %v37, 0.0
  %42 = vadd.xlane.f32.xlu0 %v41
  %v43 = vpop.xlane.xlu0 %42
  %v44 = vmul.f32 %v40, %v31
  %v45 = vmul.f32 %v43, %v31
  %v46 = vadd.f32 %v44, 1e-12
  %v47 = vadd.f32 %v45, 1e-12
  %v48 = vrsqrt.pop %v46
  %v49 = vmul.f32 %v48, %v46
  %v50 = vmul.f32 %v49, %v48
  %v51 = vmul.f32 0.5, %v50
  %v52 = vsub.f32 1.5, %v51
  %v53 = vmul.f32 %v48, %v52
  %vm54 = vweird.f32 %v46
  %vm55 = vweird.f32 %v48
  %vm56 = vmor %vm54, %vm55
  %v57 = vsel %vm56, %v48, %v53
  %v58 = vrsqrt.pop %v47
  %v59 = vmul.f32 %v58, %v47
  %v60 = vmul.f32 %v59, %v58
  %v61 = vmul.f32 0.5, %v60
  %v62 = vsub.f32 1.5, %v61
  %v63 = vmul.f32 %v58, %v62
  %vm64 = vweird.f32 %v47
  %vm65 = vweird.f32 %v58
  %vm66 = vmor %vm64, %vm65
  %v67 = vsel %vm66, %v58, %v63
  %v68 = vmul.f32 %v34, %v57
  %v69 = vmul.f32 %v35, %v67
  %v70 = vld [vmem:[%s1] sm:$0x1]
  %v72 = vperm.slane %v70, 0
  %v74 = vmul.f32 %v68, %v72
  %v75 = vmul.f32 %v69, %v72
  %v76 = vld [vmem:[%s2] sm:$0x1]
  %v78 = vperm.slane %v76, 0
  %v80 = vadd.f32 %v74, %v78
  %v81 = vadd.f32 %v75, %v78
  %v82 = vpack.c.bf16 %v80, %v80
  %v83 = vpack.c.bf16 %v81, %v81
  %vm84 = vcmask 257024
  %85 = vst.msk [vmem:[%s3] sm:$0xf] %vm84, %v82
  %86 = vst.msk [vmem:[%s3 + $0x4] sm:$0xf] %vm84, %v83
  // Predicated region
  $region14: #{llama2_model_forward.6} parent=0 // pred_check
    _
  $region15: #{llama2_model_forward.6} parent=0 // pred_check_branch
    %88 = sbr.rel (0) target = $region17
  $region16: #{llama2_model_forward.6} parent=0 // pred_region
    _
  $region17: #{llama2_model_forward.6} parent=0 // pred_fallthru
    _
  // Predicated region
  $region18: #{llama2_model_forward.6} parent=0 // pred_check
    _
  $region19: #{llama2_model_forward.6} parent=0 // pred_check_branch
    %90 = sbr.rel (0) target = $region21
  $region20: #{llama2_model_forward.6} parent=0 // pred_region
    _
  $region21: #{llama2_model_forward.6} parent=0 // pred_fallthru
    _

// kernel: llama2_model_forward.8
$region0: #{llama2_model_forward.8}
  #allocation0 [shape = 'u32[]', space=smem, size = 0x4, offset = 0x4, fixed_abs, tag = 'smem constant byte address 0x4 - core index']
  #allocation1 [shape = 'u32[72,128]{1,0:T(1,128)}', space=vmem, size = 0x9000, scoped, tag = 'internal scratch']
  %s0 = inlined_call_operand.vmem [shape: bf16[16,32], index: 0, kind: input, shape index: {}]
  %s1 = inlined_call_operand.vmem [shape: bf16[32,64], index: 1, kind: input, shape index: {}]
  %s2 = inlined_call_operand.vmem [shape: f32[1,64], index: 2, kind: input, shape index: {}]
  %s3 = inlined_call_operand.vmem [shape: bf16[64,32], index: 3, kind: input, shape index: {}]
  %s4 = inlined_call_operand.vmem [shape: f32[1,32], index: 4, kind: input, shape index: {}]
  %s5 = inlined_call_operand.vmem [shape: f32[1,32], index: 5, kind: input, shape index: {}]
  %s6 = inlined_call_operand.vmem [shape: f32[1,32], index: 6, kind: input, shape index: {}]
  %s7 = inlined_call_operand.vmem [shape: bf16[16,32], index: 7, kind: output, shape index: {}]
  %s8 = sld [smem:[#allocation0]]
  $region38: #{llama2_model_forward.8} parent=0
    _
  %s10 = ssub.s32 1, %s8
  %s11 = scalar_select 0, %s10, %s8
  // Predicated region
  $region2: #{llama2_model_forward.8} parent=0 // pred_check
    _
  $region3: #{llama2_model_forward.8} parent=0 // pred_check_branch
    %13 = sbr.rel (0) target = $region5
  $region4: #{llama2_model_forward.8} parent=0 // pred_region
    _
  $region5: #{llama2_model_forward.8} parent=0 // pred_fallthru
    _
  // Predicated region
  $region6: #{llama2_model_forward.8} parent=0 // pred_check
    _
  $region7: #{llama2_model_forward.8} parent=0 // pred_check_branch
    %15 = sbr.rel (0) target = $region9
  $region8: #{llama2_model_forward.8} parent=0 // pred_region
    _
  $region9: #{llama2_model_forward.8} parent=0 // pred_fallthru
    _
  // Predicated region
  $region10: #{llama2_model_forward.8} parent=0 // pred_check
    _
  $region11: #{llama2_model_forward.8} parent=0 // pred_check_branch
    %17 = sbr.rel (0) target = $region13
  $region12: #{llama2_model_forward.8} parent=0 // pred_region
    _
  $region13: #{llama2_model_forward.8} parent=0 // pred_fallthru
    _
  // Predicated region
  $region14: #{llama2_model_forward.8} parent=0 // pred_check
    _
  $region15: #{llama2_model_forward.8} parent=0 // pred_check_branch
    %19 = sbr.rel (0) target = $region17
  $region16: #{llama2_model_forward.8} parent=0 // pred_region
    _
  $region17: #{llama2_model_forward.8} parent=0 // pred_fallthru
    _
  // Predicated region
  $region18: #{llama2_model_forward.8} parent=0 // pred_check
    _
  $region19: #{llama2_model_forward.8} parent=0 // pred_check_branch
    %21 = sbr.rel (0) target = $region21
  $region20: #{llama2_model_forward.8} parent=0 // pred_region
    _
  $region21: #{llama2_model_forward.8} parent=0 // pred_fallthru
    _
  // Predicated region
  $region22: #{llama2_model_forward.8} parent=0 // pred_check
    _
  $region23: #{llama2_model_forward.8} parent=0 // pred_check_branch
    %23 = sbr.rel (0) target = $region25
  $region24: #{llama2_model_forward.8} parent=0 // pred_region
    _
  $region25: #{llama2_model_forward.8} parent=0 // pred_fallthru
    _
  // Predicated region
  $region26: #{llama2_model_forward.8} parent=0 // pred_check
    _
  $region27: #{llama2_model_forward.8} parent=0 // pred_check_branch
    %25 = sbr.rel (0) target = $region29
  $region28: #{llama2_model_forward.8} parent=0 // pred_region
    _
  $region29: #{llama2_model_forward.8} parent=0 // pred_fallthru
    _
  %v27 = vld [vmem:[%s0] sm:$0xf]
  %v28 = vld [vmem:[%s0 + $0x4] sm:$0xf]
  %v29 = vld [vmem:[%s1] sm:$0xf]
  %v30 = vld [vmem:[%s1 + $0x4] sm:$0xf]
  %v31 = vld [vmem:[%s1 + $0x8] sm:$0xf]
  %v32 = vld [vmem:[%s1 + $0xc] sm:$0xf]
  %v33 = vld [vmem:[%s2] sm:$0x1]
  %v35 = vperm.slane %v33, 0
  %v39 = vunpack.c.l.b16 %v27
  %v40 = vunpack.c.l.b16 %v28
  %v41 = vpack.c.b16 %v40, %v39
  %v46 = vunpack.c.l.b16 %v29
  %v47 = vunpack.c.l.b16 %v30
  %v48 = vunpack.c.l.b16 %v31
  %v49 = vunpack.c.l.b16 %v32
  %v50 = vpack.c.b16 %v47, %v46
  %v51 = vpack.c.b16 %v49, %v48
  %vm54 = vcmask 261120
  %v56 = vsel %vm54, %v41, 0
  %58 = vmatpush.bf16.msra.mxu0 0
  %59 = vmatpush.bf16.msra.mxu0 0
  %60 = vmatpush.bf16.msra.mxu0 0
  %61 = vmatpush.bf16.msra.mxu0 0
  %62 = vmatpush.bf16.msra.mxu0 0
  %63 = vmatpush.bf16.msra.mxu0 0
  %64 = vmatpush.bf16.msra.mxu0 %v51
  %65 = vmatpush.bf16.msra.mxu0 %v50
  %66 = vmatmul.bf16.gmra.mxu0 %v56
  %v67 = vpop.f32.mrf.mxu0
  %v68 = vadd.f32 %v35, %v67
  %v69 = vpop.f32.mrf.mxu0
  %v70 = vadd.f32 %v35, %v69
  %71 = vdwg.mxu0
  %v72 = vmul.f32 %v68, %v68
  %v73 = vmul.f32 %v70, %v70
  %v74 = vmul.f32 %v68, %v72
  %v75 = vmul.f32 %v70, %v73
  %v76 = vmul.f32 %v74, 0.044715
  %v77 = vmul.f32 %v75, 0.044715
  %v78 = vadd.f32 %v68, %v76
  %v79 = vadd.f32 %v70, %v77
  %v80 = vmul.f32 %v78, 0.7978846
  %v81 = vmul.f32 %v79, 0.7978846
  %v82 = vtanh.pop %v80
  %v83 = vtanh.pop %v81
  %v84 = vadd.f32 %v82, 1.0
  %v85 = vadd.f32 %v83, 1.0
  %v86 = vmul.f32 %v84, 0.5
  %v87 = vmul.f32 %v85, 0.5
  %v88 = vmul.f32 %v68, %v86
  %v89 = vmul.f32 %v70, %v87
  %v90 = vpack.c.bf16 %v89, %v88
  %v91 = vld [vmem:[%s3] sm:$0xf]
  %v92 = vld [vmem:[%s3 + $0x4] sm:$0xf]
  %v93 = vld [vmem:[%s3 + $0x8] sm:$0xf]
  %v94 = vld [vmem:[%s3 + $0xc] sm:$0xf]
  %v95 = vld [vmem:[%s3 + $0x10] sm:$0xf]
  %v96 = vld [vmem:[%s3 + $0x14] sm:$0xf]
  %v97 = vld [vmem:[%s3 + $0x18] sm:$0xf]
  %v98 = vld [vmem:[%s3 + $0x1c] sm:$0xf]
  %v99 = vld [vmem:[%s4] sm:$0x1]
  %v101 = vperm.slane %v99, 0
  %v111 = vunpack.c.l.b16 %v91
  %v112 = vunpack.c.l.b16 %v92
  %v113 = vunpack.c.l.b16 %v93
  %v114 = vunpack.c.l.b16 %v94
  %v115 = vunpack.c.l.b16 %v95
  %v116 = vunpack.c.l.b16 %v96
  %v117 = vunpack.c.l.b16 %v97
  %v118 = vunpack.c.l.b16 %v98
  %v119 = vpack.c.b16 %v112, %v111
  %v120 = vpack.c.b16 %v114, %v113
  %v121 = vpack.c.b16 %v116, %v115
  %v122 = vpack.c.b16 %v118, %v117
  %vm127 = vcmask 523264
  %v129 = vsel %vm127, %v90, 0
  %131 = vmatpush.bf16.msra.mxu0 0
  %132 = vmatpush.bf16.msra.mxu0 0
  %133 = vmatpush.bf16.msra.mxu0 0
  %134 = vmatpush.bf16.msra.mxu0 0
  %135 = vmatpush.bf16.msra.mxu0 %v122
  %136 = vmatpush.bf16.msra.mxu0 %v121
  %137 = vmatpush.bf16.msra.mxu0 %v120
  %138 = vmatpush.bf16.msra.mxu0 %v119
  %139 = vmatmul.bf16.gmra.mxu0 %v129
  %v140 = vpop.f32.mrf.mxu0
  %v141 = vadd.f32 %v101, %v140
  %v142 = vpop.f32.mrf.mxu0
  %v143 = vadd.f32 %v101, %v142
  %144 = vdwg.mxu0
  %v145 = vunpack.c.l.bf16 %v27
  %v146 = vunpack.c.l.bf16 %v28
  %v147 = vadd.f32 %v141, %v145
  %v148 = vadd.f32 %v143, %v146
  %v149 = vsel %vm54, %v147, 0.0
  %150 = vadd.xlane.f32.xlu0 %v149
  %v151 = vpop.xlane.xlu0 %150
  %v152 = vsel %vm54, %v148, 0.0
  %153 = vadd.xlane.f32.xlu0 %v152
  %v154 = vpop.xlane.xlu0 %153
  %v155 = vrcp.pop 32.0
  %v156 = vmul.f32 32.0, %v155
  %v157 = vsub.f32 1.0, %v156
  %v158 = vmul.f32 %v155, %v157
  %v159 = vadd.f32 %v155, %v158
  %vm160 = vweird.f32 %v155
  %v161 = vsel %vm160, %v155, %v159
  %v162 = vmul.f32 %v151, %v161
  %v163 = vmul.f32 %v154, %v161
  %v164 = vsub.f32 %v147, %v162
  %v165 = vsub.f32 %v148, %v163
  %v166 = vmul.f32 %v164, %v164
  %v167 = vmul.f32 %v165, %v165
  %v168 = vsel %vm54, %v166, 0.0
  %169 = vadd.xlane.f32.xlu0 %v168
  %v170 = vpop.xlane.xlu0 %169
  %v171 = vsel %vm54, %v167, 0.0
  %172 = vadd.xlane.f32.xlu0 %v171
  %v173 = vpop.xlane.xlu0 %172
  %v174 = vmul.f32 %v170, %v161
  %v175 = vmul.f32 %v173, %v161
  %v176 = vadd.f32 %v174, 1e-12
  %v177 = vadd.f32 %v175, 1e-12
  %v178 = vrsqrt.pop %v176
  %v179 = vmul.f32 %v178, %v176
  %v180 = vmul.f32 %v179, %v178
  %v181 = vmul.f32 0.5, %v180
  %v182 = vsub.f32 1.5, %v181
  %v183 = vmul.f32 %v178, %v182
  %vm184 = vweird.f32 %v176
  %vm185 = vweird.f32 %v178
  %vm186 = vmor %vm184, %vm185
  %v187 = vsel %vm186, %v178, %v183
  %v188 = vrsqrt.pop %v177
  %v189 = vmul.f32 %v188, %v177
  %v190 = vmul.f32 %v189, %v188
  %v191 = vmul.f32 0.5, %v190
  %v192 = vsub.f32 1.5, %v191
  %v193 = vmul.f32 %v188, %v192
  %vm194 = vweird.f32 %v177
  %vm195 = vweird.f32 %v188
  %vm196 = vmor %vm194, %vm195
  %v197 = vsel %vm196, %v188, %v193
  %v198 = vmul.f32 %v164, %v187
  %v199 = vmul.f32 %v165, %v197
  %v200 = vld [vmem:[%s5] sm:$0x1]
  %v202 = vperm.slane %v200, 0
  %v204 = vmul.f32 %v198, %v202
  %v205 = vmul.f32 %v199, %v202
  %v206 = vld [vmem:[%s6] sm:$0x1]
  %v208 = vperm.slane %v206, 0
  %v210 = vadd.f32 %v204, %v208
  %v211 = vadd.f32 %v205, %v208
  %v212 = vpack.c.bf16 %v210, %v210
  %v213 = vpack.c.bf16 %v211, %v211
  %vm214 = vcmask 257024
  %215 = vst.msk [vmem:[%s7] sm:$0xf] %vm214, %v212
  %216 = vst.msk [vmem:[%s7 + $0x4] sm:$0xf] %vm214, %v213
  // Predicated region
  $region30: #{llama2_model_forward.8} parent=0 // pred_check
    _
  $region31: #{llama2_model_forward.8} parent=0 // pred_check_branch
    %218 = sbr.rel (0) target = $region33
  $region32: #{llama2_model_forward.8} parent=0 // pred_region
    _
  $region33: #{llama2_model_forward.8} parent=0 // pred_fallthru
    _
  // Predicated region
  $region34: #{llama2_model_forward.8} parent=0 // pred_check
    _
  $region35: #{llama2_model_forward.8} parent=0 // pred_check_branch
    %220 = sbr.rel (0) target = $region37
  $region36: #{llama2_model_forward.8} parent=0 // pred_region
    _
  $region37: #{llama2_model_forward.8} parent=0 // pred_fallthru
    _

// kernel: llama2_model_forward.7
$region0: #{llama2_model_forward.7}
  #allocation0 [shape = 'u32[]', space=smem, size = 0x4, offset = 0x4, fixed_abs, tag = 'smem constant byte address 0x4 - core index']
  #allocation1 [shape = 'u32[72,128]{1,0:T(1,128)}', space=vmem, size = 0x9000, scoped, tag = 'internal scratch']
  #allocation2 [shape = 'bf16[8,32]{1,0:T(8,128)(2,1)}', space=vmem, size = 0x800, scoped, tag = 'scratch operand']
  %s0 = inlined_call_operand.vmem [shape: bf16[2,8,32], index: 0, kind: input, shape index: {}]
  %s1 = inlined_call_operand.vmem [shape: f32[2,1,8], index: 1, kind: input, shape index: {}]
  %s2 = inlined_call_operand.vmem [shape: bf16[32,96], index: 2, kind: input, shape index: {}]
  %s3 = inlined_call_operand.vmem [shape: f32[1,96], index: 3, kind: input, shape index: {}]
  %s4 = inlined_call_operand.vmem [shape: bf16[32,32], index: 4, kind: input, shape index: {}]
  %s5 = inlined_call_operand.vmem [shape: f32[1,32], index: 5, kind: input, shape index: {}]
  %s6 = inlined_call_operand.vmem [shape: f32[1,32], index: 6, kind: input, shape index: {}]
  %s7 = inlined_call_operand.vmem [shape: f32[1,32], index: 7, kind: input, shape index: {}]
  %s8 = inlined_call_operand.vmem [shape: bf16[2,8,32], index: 8, kind: output, shape index: {}]
  %s9 = sld [smem:[#allocation0]]
  $region65: #{llama2_model_forward.7} parent=0
    _
  %s11 = ssub.s32 1, %s9
  %s12 = scalar_select 0, %s11, %s9
  loop: start=0, step=1, limit=4
  $region2: #{llama2_model_forward.7} parent=0 // loop_pre_header
    _
  $region3: #{llama2_model_forward.7} parent=0 // loop_header
    %s14 = sphi 0, %s18
    %p15 = scmp.ge.s32.totalorder %s14, 4
    %s24 = sphi 0, %s26
    %s27 = sphi 0, %s24
    %s28 = sphi 0, %s27
    %s44 = sphi 0, %s28
    %s50 = sphi 0, %s52
    %s53 = sphi 0, %s50
    %s54 = sphi 0, %s53
    %s70 = sphi 0, %s54
    %s74 = sphi 0, %s74
    %s76 = sphi 0, %s74
    %s77 = sphi 0, %s76
    %s91 = sphi 0, %s77
    %s95 = sphi 0, %s95
    %s97 = sphi 0, %s95
    %s98 = sphi 0, %s97
    %s112 = sphi 0, %s98
    %s116 = sphi 0, %s116
    %s118 = sphi 0, %s116
    %s119 = sphi 0, %s118
    %s133 = sphi 0, %s119
    %s137 = sphi 0, %s137
    %s139 = sphi 0, %s137
    %s140 = sphi 0, %s139
    %s154 = sphi 0, %s140
    %s158 = sphi 0, %s158
    %s160 = sphi 0, %s158
    %s161 = sphi 0, %s160
    %s175 = sphi 0, %s161
    %s179 = sphi 0, %s179
    %s181 = sphi 0, %s179
    %s182 = sphi 0, %s181
    %s196 = sphi 0, %s182
    %s202 = sphi 0, %s204
    %s205 = sphi 0, %s202
    %s206 = sphi 0, %s205
    %s222 = sphi 0, %s206
  $region4: #{llama2_model_forward.7} parent=0 // loop_header_branch
    %17 = sbr.rel (%p15) target = $region8
  $region5: #{llama2_model_forward.7} parent=0 // loop_body
    %s19 = ssub.s32 %s14, 1
    %s20 = ssub.s32 %s14, 2
    %s21 = sadd.s32 %s14, 1
    %s22 = ssub.s32 %s14, %s21
    %p23 = scmp.eq.s32.totalorder %s22, 0
    %s25 = sadd.s32 %s24, 1
    %s26 = scalar_select %p23, %s24, %s25
    %p29 = pneg %p23
    %p30 = scmp.eq.s32.totalorder %s14, 1
    %p31 = por %p29, %p30
    %p32 = scmp.ne.s32.totalorder %s24, %s27
    %p33 = scmp.eq.s32.totalorder %s14, 0
    %p34 = por %p32, %p33
    %p35 = scmp.ne.s32.totalorder %s24, %s27
    %p36 = scmp.eq.s32.totalorder %s19, 1
    %p37 = por %p35, %p36
    %p38 = scmp.ne.s32.totalorder %s27, %s28
    %p39 = scmp.eq.s32.totalorder %s19, 0
    %p40 = por %p38, %p39
    %p41 = scmp.ne.s32.totalorder %s27, %s28
    %p42 = scmp.eq.s32.totalorder %s20, 1
    %p43 = por %p41, %p42
    %p45 = scmp.ne.s32.totalorder %s28, %s44
    %p46 = scmp.eq.s32.totalorder %s20, 0
    %p47 = por %p45, %p46
    %s48 = ssub.s32 %s14, %s21
    %p49 = scmp.eq.s32.totalorder %s48, 0
    %s51 = sadd.s32 %s50, 1
    %s52 = scalar_select %p49, %s50, %s51
    %p55 = pneg %p49
    %p56 = scmp.eq.s32.totalorder %s14, 1
    %p57 = por %p55, %p56
    %p58 = scmp.ne.s32.totalorder %s50, %s53
    %p59 = scmp.eq.s32.totalorder %s14, 0
    %p60 = por %p58, %p59
    %p61 = scmp.ne.s32.totalorder %s50, %s53
    %p62 = scmp.eq.s32.totalorder %s19, 1
    %p63 = por %p61, %p62
    %p64 = scmp.ne.s32.totalorder %s53, %s54
    %p65 = scmp.eq.s32.totalorder %s19, 0
    %p66 = por %p64, %p65
    %p67 = scmp.ne.s32.totalorder %s53, %s54
    %p68 = scmp.eq.s32.totalorder %s20, 1
    %p69 = por %p67, %p68
    %p71 = scmp.ne.s32.totalorder %s54, %s70
    %p72 = scmp.eq.s32.totalorder %s20, 0
    %p73 = por %p71, %p72
    %s75 = sadd.s32 %s74, 1
    %p78 = scmp.eq.s32.totalorder %s14, 1
    %p79 = scmp.ne.s32.totalorder %s74, %s76
    %p80 = scmp.eq.s32.totalorder %s14, 0
    %p81 = por %p79, %p80
    %p82 = scmp.ne.s32.totalorder %s74, %s76
    %p83 = scmp.eq.s32.totalorder %s19, 1
    %p84 = por %p82, %p83
    %p85 = scmp.ne.s32.totalorder %s76, %s77
    %p86 = scmp.eq.s32.totalorder %s19, 0
    %p87 = por %p85, %p86
    %p88 = scmp.ne.s32.totalorder %s76, %s77
    %p89 = scmp.eq.s32.totalorder %s20, 1
    %p90 = por %p88, %p89
    %p92 = scmp.ne.s32.totalorder %s77, %s91
    %p93 = scmp.eq.s32.totalorder %s20, 0
    %p94 = por %p92, %p93
    %s96 = sadd.s32 %s95, 1
    %p99 = scmp.eq.s32.totalorder %s14, 1
    %p100 = scmp.ne.s32.totalorder %s95, %s97
    %p101 = scmp.eq.s32.totalorder %s14, 0
    %p102 = por %p100, %p101
    %p103 = scmp.ne.s32.totalorder %s95, %s97
    %p104 = scmp.eq.s32.totalorder %s19, 1
    %p105 = por %p103, %p104
    %p106 = scmp.ne.s32.totalorder %s97, %s98
    %p107 = scmp.eq.s32.totalorder %s19, 0
    %p108 = por %p106, %p107
    %p109 = scmp.ne.s32.totalorder %s97, %s98
    %p110 = scmp.eq.s32.totalorder %s20, 1
    %p111 = por %p109, %p110
    %p113 = scmp.ne.s32.totalorder %s98, %s112
    %p114 = scmp.eq.s32.totalorder %s20, 0
    %p115 = por %p113, %p114
    %s117 = sadd.s32 %s116, 1
    %p120 = scmp.eq.s32.totalorder %s14, 1
    %p121 = scmp.ne.s32.totalorder %s116, %s118
    %p122 = scmp.eq.s32.totalorder %s14, 0
    %p123 = por %p121, %p122
    %p124 = scmp.ne.s32.totalorder %s116, %s118
    %p125 = scmp.eq.s32.totalorder %s19, 1
    %p126 = por %p124, %p125
    %p127 = scmp.ne.s32.totalorder %s118, %s119
    %p128 = scmp.eq.s32.totalorder %s19, 0
    %p129 = por %p127, %p128
    %p130 = scmp.ne.s32.totalorder %s118, %s119
    %p131 = scmp.eq.s32.totalorder %s20, 1
    %p132 = por %p130, %p131
    %p134 = scmp.ne.s32.totalorder %s119, %s133
    %p135 = scmp.eq.s32.totalorder %s20, 0
    %p136 = por %p134, %p135
    %s138 = sadd.s32 %s137, 1
    %p141 = scmp.eq.s32.totalorder %s14, 1
    %p142 = scmp.ne.s32.totalorder %s137, %s139
    %p143 = scmp.eq.s32.totalorder %s14, 0
    %p144 = por %p142, %p143
    %p145 = scmp.ne.s32.totalorder %s137, %s139
    %p146 = scmp.eq.s32.totalorder %s19, 1
    %p147 = por %p145, %p146
    %p148 = scmp.ne.s32.totalorder %s139, %s140
    %p149 = scmp.eq.s32.totalorder %s19, 0
    %p150 = por %p148, %p149
    %p151 = scmp.ne.s32.totalorder %s139, %s140
    %p152 = scmp.eq.s32.totalorder %s20, 1
    %p153 = por %p151, %p152
    %p155 = scmp.ne.s32.totalorder %s140, %s154
    %p156 = scmp.eq.s32.totalorder %s20, 0
    %p157 = por %p155, %p156
    %s159 = sadd.s32 %s158, 1
    %p162 = scmp.eq.s32.totalorder %s14, 1
    %p163 = scmp.ne.s32.totalorder %s158, %s160
    %p164 = scmp.eq.s32.totalorder %s14, 0
    %p165 = por %p163, %p164
    %p166 = scmp.ne.s32.totalorder %s158, %s160
    %p167 = scmp.eq.s32.totalorder %s19, 1
    %p168 = por %p166, %p167
    %p169 = scmp.ne.s32.totalorder %s160, %s161
    %p170 = scmp.eq.s32.totalorder %s19, 0
    %p171 = por %p169, %p170
    %p172 = scmp.ne.s32.totalorder %s160, %s161
    %p173 = scmp.eq.s32.totalorder %s20, 1
    %p174 = por %p172, %p173
    %p176 = scmp.ne.s32.totalorder %s161, %s175
    %p177 = scmp.eq.s32.totalorder %s20, 0
    %p178 = por %p176, %p177
    %s180 = sadd.s32 %s179, 1
    %p183 = scmp.eq.s32.totalorder %s14, 1
    %p184 = scmp.ne.s32.totalorder %s179, %s181
    %p185 = scmp.eq.s32.totalorder %s14, 0
    %p186 = por %p184, %p185
    %p187 = scmp.ne.s32.totalorder %s179, %s181
    %p188 = scmp.eq.s32.totalorder %s19, 1
    %p189 = por %p187, %p188
    %p190 = scmp.ne.s32.totalorder %s181, %s182
    %p191 = scmp.eq.s32.totalorder %s19, 0
    %p192 = por %p190, %p191
    %p193 = scmp.ne.s32.totalorder %s181, %s182
    %p194 = scmp.eq.s32.totalorder %s20, 1
    %p195 = por %p193, %p194
    %p197 = scmp.ne.s32.totalorder %s182, %s196
    %p198 = scmp.eq.s32.totalorder %s20, 0
    %p199 = por %p197, %p198
    %s200 = ssub.s32 %s14, %s21
    %p201 = scmp.eq.s32.totalorder %s200, 0
    %s203 = sadd.s32 %s202, 1
    %s204 = scalar_select %p201, %s202, %s203
    %p207 = pneg %p201
    %p208 = scmp.eq.s32.totalorder %s14, 1
    %p209 = por %p207, %p208
    %p210 = scmp.ne.s32.totalorder %s202, %s205
    %p211 = scmp.eq.s32.totalorder %s14, 0
    %p212 = por %p210, %p211
    %p213 = scmp.ne.s32.totalorder %s202, %s205
    %p214 = scmp.eq.s32.totalorder %s19, 1
    %p215 = por %p213, %p214
    %p216 = scmp.ne.s32.totalorder %s205, %s206
    %p217 = scmp.eq.s32.totalorder %s19, 0
    %p218 = por %p216, %p217
    %p219 = scmp.ne.s32.totalorder %s205, %s206
    %p220 = scmp.eq.s32.totalorder %s20, 1
    %p221 = por %p219, %p220
    %p223 = scmp.ne.s32.totalorder %s206, %s222
    %p224 = scmp.eq.s32.totalorder %s20, 0
    %p225 = por %p223, %p224
    %p226 = scmp.le.s32.totalorder 1, %s14
    %p227 = scmp.lt.s32.totalorder %s14, 3
    %p228 = pnand %p226, %p227
    %p229 = pneg %p228
    // Predicated region
    $region9: #{llama2_model_forward.7} parent=5 // pred_check
      _
    $region10: #{llama2_model_forward.7} parent=5 // pred_check_branch
      %231 = sbr.rel (%p228) target = $region12
    $region11: #{llama2_model_forward.7} parent=5 // pred_region
      %s232 = ssub.s32 %s14, 1
      // Predicated region
      $region13: #{llama2_model_forward.7} parent=11 // pred_check
        %p233 = pneg %p87
      $region14: #{llama2_model_forward.7} parent=11 // pred_check_branch
        %235 = sbr.rel (%p233) target = $region16
      $region15: #{llama2_model_forward.7} parent=11 // pred_region
        _
      $region16: #{llama2_model_forward.7} parent=11 // pred_fallthru
        _
      // Predicated region
      $region17: #{llama2_model_forward.7} parent=11 // pred_check
        %p236 = pneg %p108
      $region18: #{llama2_model_forward.7} parent=11 // pred_check_branch
        %238 = sbr.rel (%p236) target = $region20
      $region19: #{llama2_model_forward.7} parent=11 // pred_region
        _
      $region20: #{llama2_model_forward.7} parent=11 // pred_fallthru
        _
      // Predicated region
      $region21: #{llama2_model_forward.7} parent=11 // pred_check
        %p239 = pneg %p129
      $region22: #{llama2_model_forward.7} parent=11 // pred_check_branch
        %241 = sbr.rel (%p239) target = $region24
      $region23: #{llama2_model_forward.7} parent=11 // pred_region
        _
      $region24: #{llama2_model_forward.7} parent=11 // pred_fallthru
        _
      // Predicated region
      $region25: #{llama2_model_forward.7} parent=11 // pred_check
        %p242 = pneg %p150
      $region26: #{llama2_model_forward.7} parent=11 // pred_check_branch
        %244 = sbr.rel (%p242) target = $region28
      $region27: #{llama2_model_forward.7} parent=11 // pred_region
        _
      $region28: #{llama2_model_forward.7} parent=11 // pred_fallthru
        _
      // Predicated region
      $region29: #{llama2_model_forward.7} parent=11 // pred_check
        %p245 = pneg %p171
      $region30: #{llama2_model_forward.7} parent=11 // pred_check_branch
        %247 = sbr.rel (%p245) target = $region32
      $region31: #{llama2_model_forward.7} parent=11 // pred_region
        _
      $region32: #{llama2_model_forward.7} parent=11 // pred_fallthru
        _
      // Predicated region
      $region33: #{llama2_model_forward.7} parent=11 // pred_check
        %p248 = pneg %p192
      $region34: #{llama2_model_forward.7} parent=11 // pred_check_branch
        %250 = sbr.rel (%p248) target = $region36
      $region35: #{llama2_model_forward.7} parent=11 // pred_region
        _
      $region36: #{llama2_model_forward.7} parent=11 // pred_fallthru
        _
    $region12: #{llama2_model_forward.7} parent=5 // pred_fallthru
      _
    %p251 = scmp.lt.s32.totalorder %s14, 2
    // Predicated region
    $region37: #{llama2_model_forward.7} parent=5 // pred_check
      %p252 = pneg %p251
    $region38: #{llama2_model_forward.7} parent=5 // pred_check_branch
      %254 = sbr.rel (%p252) target = $region40
    $region39: #{llama2_model_forward.7} parent=5 // pred_region
      // Predicated region
      $region41: #{llama2_model_forward.7} parent=39 // pred_check
        %p255 = pneg %p34
      $region42: #{llama2_model_forward.7} parent=39 // pred_check_branch
        %257 = sbr.rel (%p255) target = $region44
      $region43: #{llama2_model_forward.7} parent=39 // pred_region
        %p258 = scmp.lt.s32.totalorder %s14, 1
        %s259 = scalar_select %p258, %s14, 1
        %s260 = smul.addr %s259, 4
        %s261 = scalar_lea.vmem %s0, %s260
      $region44: #{llama2_model_forward.7} parent=39 // pred_fallthru
        _
      // Predicated region
      $region45: #{llama2_model_forward.7} parent=39 // pred_check
        %p262 = pneg %p60
      $region46: #{llama2_model_forward.7} parent=39 // pred_check_branch
        %264 = sbr.rel (%p262) target = $region48
      $region47: #{llama2_model_forward.7} parent=39 // pred_region
        %p265 = scmp.lt.s32.totalorder %s14, 1
        %s266 = scalar_select %p265, %s14, 1
        %s267 = scalar_lea.vmem %s1, %s266
      $region48: #{llama2_model_forward.7} parent=39 // pred_fallthru
        _
    $region40: #{llama2_model_forward.7} parent=5 // pred_fallthru
      _
    %p268 = scmp.le.s32.totalorder 1, %s14
    %p269 = scmp.lt.s32.totalorder %s14, 3
    %p270 = pnand %p268, %p269
    %p271 = pneg %p270
    // Predicated region
    $region49: #{llama2_model_forward.7} parent=5 // pred_check
      _
    $region50: #{llama2_model_forward.7} parent=5 // pred_check_branch
      %273 = sbr.rel (%p270) target = $region52
    $region51: #{llama2_model_forward.7} parent=5 // pred_region
      %s274 = ssub.s32 %s14, 1
      %p275 = scmp.lt.s32.totalorder %s19, 1
      %s276 = scalar_select %p275, %s19, 1
      %s277 = smul.addr %s276, 4
      %s278 = scalar_lea.vmem %s0, %s277
      %p279 = pneg %p40
      %p280 = pneg %p37
      %p281 = scmp.lt.s32.totalorder %s19, 1
      %s282 = scalar_select %p281, %s19, 1
      %s283 = scalar_lea.vmem %s1, %s282
      %p284 = pneg %p66
      %p285 = pneg %p63
      %p286 = pneg %p87
      %p287 = pneg %p84
      %p288 = pneg %p108
      %p289 = pneg %p105
      %p290 = pneg %p129
      %p291 = pneg %p126
      %p292 = pneg %p150
      %p293 = pneg %p147
      %p294 = pneg %p171
      %p295 = pneg %p168
      %p296 = pneg %p192
      %p297 = pneg %p189
      %p298 = pneg %p218
      %p299 = pneg %p215
      %p300 = scmp.lt.s32.totalorder %s19, 1
      %s301 = scalar_select %p300, %s19, 1
      %s302 = smul.addr %s301, 4
      %s303 = scalar_lea.vmem %s8, %s302
      %p304 = scmp.lt.s32.totalorder %s19, 1
      %s305 = scalar_select %p304, %s19, 1
      %s306 = smul.addr %s305, 4
      %s307 = scalar_lea.vmem %s0, %s306
      %p308 = scmp.lt.s32.totalorder %s19, 1
      %s309 = scalar_select %p308, %s19, 1
      %s310 = scalar_lea.vmem %s1, %s309
      %p311 = scmp.lt.s32.totalorder %s19, 1
      %s312 = scalar_select %p311, %s19, 1
      %s313 = smul.addr %s312, 4
      %s314 = scalar_lea.vmem %s8, %s313
      %v316 = vld [vmem:[%s307] sm:$0xf]
      %v317 = vld [vmem:[%s310] sm:$0x1]
      %v318 = vld [vmem:[%s2] sm:$0xf]
      %v319 = vld [vmem:[%s2 + $0x4] sm:$0xf]
      %v320 = vld [vmem:[%s2 + $0x8] sm:$0xf]
      %v321 = vld [vmem:[%s2 + $0xc] sm:$0xf]
      %v322 = vld [vmem:[%s3] sm:$0x1]
      %v324 = vperm.slane %v322, 0
      %v330 = vunpack.c.l.b16 %v318
      %v331 = vunpack.c.l.b16 %v319
      %v332 = vunpack.c.l.b16 %v320
      %v333 = vunpack.c.l.b16 %v321
      %v334 = vpack.c.b16 %v331, %v330
      %v335 = vpack.c.b16 %v333, %v332
      %vm338 = vcmask 261120
      %v340 = vsel %vm338, %v316, 0
      %342 = vmatpush.bf16.msra.mxu0 0
      %343 = vmatpush.bf16.msra.mxu0 0
      %344 = vmatpush.bf16.msra.mxu0 0
      %345 = vmatpush.bf16.msra.mxu0 0
      %346 = vmatpush.bf16.msra.mxu0 0
      %347 = vmatpush.bf16.msra.mxu0 0
      %348 = vmatpush.bf16.msra.mxu0 %v335
      %349 = vmatpush.bf16.msra.mxu0 %v334
      %350 = vmatmul.bf16.gmra.mxu0 %v340
      %v351 = vpop.f32.mrf.mxu0
      %v352 = vadd.f32 %v324, %v351
      %v353 = vpop.f32.mrf.mxu0
      %354 = vdwg.mxu0
      %v355 = vpack.c.bf16 %v352, %v352
      %v357 = vperm.slane %v317, 0
      %v360 = vunpack.c.l.b16 %v355
      %v361 = vpack.c.b16 %v360, %v360
      %362 = vrot.lane.b32.xlu0 %v361, 96
      %v363 = vpop.permute.xlu0 %362
      %vm364 = vcmask 64512
      %v366 = vsel %vm364, %v355, 0
      %v369 = vsel %vm364, %v363, 0
      %371 = vmatpush.bf16.xpose.msra.mxu0 0
      %372 = vmatpush.bf16.xpose.msra.mxu0 0
      %373 = vmatpush.bf16.xpose.msra.mxu0 0
      %374 = vmatpush.bf16.xpose.msra.mxu0 0
      %375 = vmatpush.bf16.xpose.msra.mxu0 0
      %376 = vmatpush.bf16.xpose.msra.mxu0 0
      %377 = vmatpush.bf16.xpose.msra.mxu0 0
      %378 = vmatpush.bf16.xpose.msra.mxu0 %v369
      %379 = vmatmul.bf16.gmra.mxu0 %v366
      %v380 = vpop.f32.mrf.mxu0
      %v381 = vadd.f32 %v357, %v380
      %v382 = vpop.f32.mrf.mxu0
      %383 = vdwg.mxu0
      %v384 = vsel %vm364, %v381, -inf
      %385 = vmax.xlane.f32.xlu0 %v384
      %v386 = vpop.xlane.xlu0 %385
      %v387 = vsub.f32 %v381, %v386
      %v388 = vmul.f32 %v387, 1.442695
      %v389 = vpow.pop %v388
      %v390 = vsel %vm364, %v389, 0.0
      %391 = vadd.xlane.f32.xlu0 %v390
      %v392 = vpop.xlane.xlu0 %391
      %v393 = vrcp.pop %v392
      %v394 = vmul.f32 %v389, %v393
      %v395 = vpack.c.bf16 %v394, %v394
      %396 = vrot.lane.b32.xlu0 %v361, 64
      %v397 = vpop.permute.xlu0 %396
      %v399 = vsel %vm364, %v395, 0
      %vm401 = vcmask 1043456
      %v403 = vsel %vm401, %v397, 0
      %405 = vmatpush.bf16.msra.mxu0 0
      %406 = vmatpush.bf16.msra.mxu0 0
      %407 = vmatpush.bf16.msra.mxu0 0
      %408 = vmatpush.bf16.msra.mxu0 0
      %409 = vmatpush.bf16.msra.mxu0 0
      %410 = vmatpush.bf16.msra.mxu0 0
      %411 = vmatpush.bf16.msra.mxu0 0
      %412 = vmatpush.bf16.msra.mxu0 %v403
      %413 = vmatmul.bf16.gmra.mxu0 %v399
      %v414 = vpop.f32.mrf.mxu0
      %v415 = vadd.f32 0.0, %v414
      %v416 = vpop.f32.mrf.mxu0
      %417 = vdwg.mxu0
      %v418 = vpack.c.bf16 %v415, %v415
      %vm419 = vcmask 60416
      %420 = vst.msk [vmem:[#allocation2] sm:$0xf] %vm419, %v418
      %421 = vrot.lane.b32.xlu0 %v361, 120
      %v422 = vpop.permute.xlu0 %421
      %423 = vrot.lane.b32.xlu0 %v361, 88
      %v424 = vpop.permute.xlu0 %423
      %v426 = vsel %vm364, %v422, 0
      %v429 = vsel %vm364, %v424, 0
      %431 = vmatpush.bf16.xpose.msra.mxu0 0
      %432 = vmatpush.bf16.xpose.msra.mxu0 0
      %433 = vmatpush.bf16.xpose.msra.mxu0 0
      %434 = vmatpush.bf16.xpose.msra.mxu0 0
      %435 = vmatpush.bf16.xpose.msra.mxu0 0
      %436 = vmatpush.bf16.xpose.msra.mxu0 0
      %437 = vmatpush.bf16.xpose.msra.mxu0 0
      %438 = vmatpush.bf16.xpose.msra.mxu0 %v429
      %439 = vmatmul.bf16.gmra.mxu0 %v426
      %v440 = vpop.f32.mrf.mxu0
      %v441 = vadd.f32 %v357, %v440
      %v442 = vpop.f32.mrf.mxu0
      %443 = vdwg.mxu0
      %v444 = vsel %vm364, %v441, -inf
      %445 = vmax.xlane.f32.xlu0 %v444
      %v446 = vpop.xlane.xlu0 %445
      %v447 = vsub.f32 %v441, %v446
      %v448 = vmul.f32 %v447, 1.442695
      %v449 = vpow.pop %v448
      %v450 = vsel %vm364, %v449, 0.0
      %451 = vadd.xlane.f32.xlu0 %v450
      %v452 = vpop.xlane.xlu0 %451
      %v453 = vrcp.pop %v452
      %v454 = vmul.f32 %v449, %v453
      %v455 = vpack.c.bf16 %v454, %v454
      %456 = vrot.lane.b32.xlu0 %v361, 56
      %v457 = vpop.permute.xlu0 %456
      %v459 = vsel %vm364, %v455, 0
      %v462 = vsel %vm401, %v457, 0
      %464 = vmatpush.bf16.msra.mxu0 0
      %465 = vmatpush.bf16.msra.mxu0 0
      %466 = vmatpush.bf16.msra.mxu0 0
      %467 = vmatpush.bf16.msra.mxu0 0
      %468 = vmatpush.bf16.msra.mxu0 0
      %469 = vmatpush.bf16.msra.mxu0 0
      %470 = vmatpush.bf16.msra.mxu0 0
      %471 = vmatpush.bf16.msra.mxu0 %v462
      %472 = vmatmul.bf16.gmra.mxu0 %v459
      %v473 = vpop.f32.mrf.mxu0
      %v474 = vadd.f32 0.0, %v473
      %v475 = vpop.f32.mrf.mxu0
      %476 = vdwg.mxu0
      %v477 = vpack.c.bf16 %v474, %v474
      %479 = vrot.lane.b32.xlu0 %v477, 8
      %v480 = vpop.permute.xlu0 %479
      %vm482 = vcmask 126016
      %483 = vst.msk [vmem:[#allocation2] sm:$0xf] %vm482, %v480
      %484 = vrot.lane.b32.xlu0 %v361, 112
      %v485 = vpop.permute.xlu0 %484
      %486 = vrot.lane.b32.xlu0 %v361, 80
      %v487 = vpop.permute.xlu0 %486
      %v489 = vsel %vm364, %v485, 0
      %v492 = vsel %vm364, %v487, 0
      %494 = vmatpush.bf16.xpose.msra.mxu0 0
      %495 = vmatpush.bf16.xpose.msra.mxu0 0
      %496 = vmatpush.bf16.xpose.msra.mxu0 0
      %497 = vmatpush.bf16.xpose.msra.mxu0 0
      %498 = vmatpush.bf16.xpose.msra.mxu0 0
      %499 = vmatpush.bf16.xpose.msra.mxu0 0
      %500 = vmatpush.bf16.xpose.msra.mxu0 0
      %501 = vmatpush.bf16.xpose.msra.mxu0 %v492
      %502 = vmatmul.bf16.gmra.mxu0 %v489
      %v503 = vpop.f32.mrf.mxu0
      %v504 = vadd.f32 %v357, %v503
      %v505 = vpop.f32.mrf.mxu0
      %506 = vdwg.mxu0
      %v507 = vsel %vm364, %v504, -inf
      %508 = vmax.xlane.f32.xlu0 %v507
      %v509 = vpop.xlane.xlu0 %508
      %v510 = vsub.f32 %v504, %v509
      %v511 = vmul.f32 %v510, 1.442695
      %v512 = vpow.pop %v511
      %v513 = vsel %vm364, %v512, 0.0
      %514 = vadd.xlane.f32.xlu0 %v513
      %v515 = vpop.xlane.xlu0 %514
      %v516 = vrcp.pop %v515
      %v517 = vmul.f32 %v512, %v516
      %v518 = vpack.c.bf16 %v517, %v517
      %519 = vrot.lane.b32.xlu0 %v361, 48
      %v520 = vpop.permute.xlu0 %519
      %v522 = vsel %vm364, %v518, 0
      %v525 = vsel %vm401, %v520, 0
      %527 = vmatpush.bf16.msra.mxu0 0
      %528 = vmatpush.bf16.msra.mxu0 0
      %529 = vmatpush.bf16.msra.mxu0 0
      %530 = vmatpush.bf16.msra.mxu0 0
      %531 = vmatpush.bf16.msra.mxu0 0
      %532 = vmatpush.bf16.msra.mxu0 0
      %533 = vmatpush.bf16.msra.mxu0 0
      %534 = vmatpush.bf16.msra.mxu0 %v525
      %535 = vmatmul.bf16.gmra.mxu0 %v522
      %v536 = vpop.f32.mrf.mxu0
      %v537 = vadd.f32 0.0, %v536
      %v538 = vpop.f32.mrf.mxu0
      %539 = vdwg.mxu0
      %v540 = vpack.c.bf16 %v537, %v537
      %542 = vrot.lane.b32.xlu0 %v540, 16
      %v543 = vpop.permute.xlu0 %542
      %vm545 = vcmask 191616
      %546 = vst.msk [vmem:[#allocation2] sm:$0xf] %vm545, %v543
      %547 = vrot.lane.b32.xlu0 %v361, 104
      %v548 = vpop.permute.xlu0 %547
      %549 = vrot.lane.b32.xlu0 %v361, 72
      %v550 = vpop.permute.xlu0 %549
      %v552 = vsel %vm364, %v548, 0
      %v555 = vsel %vm364, %v550, 0
      %557 = vmatpush.bf16.xpose.msra.mxu0 0
      %558 = vmatpush.bf16.xpose.msra.mxu0 0
      %559 = vmatpush.bf16.xpose.msra.mxu0 0
      %560 = vmatpush.bf16.xpose.msra.mxu0 0
      %561 = vmatpush.bf16.xpose.msra.mxu0 0
      %562 = vmatpush.bf16.xpose.msra.mxu0 0
      %563 = vmatpush.bf16.xpose.msra.mxu0 0
      %564 = vmatpush.bf16.xpose.msra.mxu0 %v555
      %565 = vmatmul.bf16.gmra.mxu0 %v552
      %v566 = vpop.f32.mrf.mxu0
      %v567 = vadd.f32 %v357, %v566
      %v568 = vpop.f32.mrf.mxu0
      %569 = vdwg.mxu0
      %v570 = vsel %vm364, %v567, -inf
      %571 = vmax.xlane.f32.xlu0 %v570
      %v572 = vpop.xlane.xlu0 %571
      %v573 = vsub.f32 %v567, %v572
      %v574 = vmul.f32 %v573, 1.442695
      %v575 = vpow.pop %v574
      %v576 = vsel %vm364, %v575, 0.0
      %577 = vadd.xlane.f32.xlu0 %v576
      %v578 = vpop.xlane.xlu0 %577
      %v579 = vrcp.pop %v578
      %v580 = vmul.f32 %v575, %v579
      %v581 = vpack.c.bf16 %v580, %v580
      %582 = vrot.lane.b32.xlu0 %v361, 40
      %v583 = vpop.permute.xlu0 %582
      %v585 = vsel %vm364, %v581, 0
      %v588 = vsel %vm401, %v583, 0
      %590 = vmatpush.bf16.msra.mxu0 0
      %591 = vmatpush.bf16.msra.mxu0 0
      %592 = vmatpush.bf16.msra.mxu0 0
      %593 = vmatpush.bf16.msra.mxu0 0
      %594 = vmatpush.bf16.msra.mxu0 0
      %595 = vmatpush.bf16.msra.mxu0 0
      %596 = vmatpush.bf16.msra.mxu0 0
      %597 = vmatpush.bf16.msra.mxu0 %v588
      %598 = vmatmul.bf16.gmra.mxu0 %v585
      %v599 = vpop.f32.mrf.mxu0
      %v600 = vadd.f32 0.0, %v599
      %v601 = vpop.f32.mrf.mxu0
      %602 = vdwg.mxu0
      %v603 = vpack.c.bf16 %v600, %v600
      %605 = vrot.lane.b32.xlu0 %v603, 24
      %v606 = vpop.permute.xlu0 %605
      %vm608 = vcmask 257216
      %609 = vst.msk [vmem:[#allocation2] sm:$0xf] %vm608, %v606
      %v610 = vld [vmem:[#allocation2] sm:$0xf]
      %v611 = vld [vmem:[%s4] sm:$0xf]
      %v612 = vld [vmem:[%s4 + $0x4] sm:$0xf]
      %v613 = vld [vmem:[%s4 + $0x8] sm:$0xf]
      %v614 = vld [vmem:[%s4 + $0xc] sm:$0xf]
      %v615 = vld [vmem:[%s5] sm:$0x1]
      %v617 = vperm.slane %v615, 0
      %v623 = vunpack.c.l.b16 %v611
      %v624 = vunpack.c.l.b16 %v612
      %v625 = vunpack.c.l.b16 %v613
      %v626 = vunpack.c.l.b16 %v614
      %v627 = vpack.c.b16 %v624, %v623
      %v628 = vpack.c.b16 %v626, %v625
      %v632 = vsel %vm338, %v610, 0
      %634 = vmatpush.bf16.msra.mxu0 0
      %635 = vmatpush.bf16.msra.mxu0 0
      %636 = vmatpush.bf16.msra.mxu0 0
      %637 = vmatpush.bf16.msra.mxu0 0
      %638 = vmatpush.bf16.msra.mxu0 0
      %639 = vmatpush.bf16.msra.mxu0 0
      %640 = vmatpush.bf16.msra.mxu0 %v628
      %641 = vmatpush.bf16.msra.mxu0 %v627
      %642 = vmatmul.bf16.gmra.mxu0 %v632
      %v643 = vpop.f32.mrf.mxu0
      %v644 = vadd.f32 %v617, %v643
      %v645 = vpop.f32.mrf.mxu0
      %646 = vdwg.mxu0
      %v647 = vunpack.c.l.bf16 %v316
      %v648 = vadd.f32 %v644, %v647
      %v649 = vsel %vm338, %v648, 0.0
      %650 = vadd.xlane.f32.xlu0 %v649
      %v651 = vpop.xlane.xlu0 %650
      %v652 = vrcp.pop 32.0
      %v653 = vmul.f32 32.0, %v652
      %v654 = vsub.f32 1.0, %v653
      %v655 = vmul.f32 %v652, %v654
      %v656 = vadd.f32 %v652, %v655
      %vm657 = vweird.f32 %v652
      %v658 = vsel %vm657, %v652, %v656
      %v659 = vmul.f32 %v651, %v658
      %v660 = vsub.f32 %v648, %v659
      %v661 = vmul.f32 %v660, %v660
      %v662 = vsel %vm338, %v661, 0.0
      %663 = vadd.xlane.f32.xlu0 %v662
      %v664 = vpop.xlane.xlu0 %663
      %v665 = vmul.f32 %v664, %v658
      %v666 = vadd.f32 %v665, 1e-12
      %v667 = vrsqrt.pop %v666
      %v668 = vmul.f32 %v667, %v666
      %v669 = vmul.f32 %v668, %v667
      %v670 = vmul.f32 0.5, %v669
      %v671 = vsub.f32 1.5, %v670
      %v672 = vmul.f32 %v667, %v671
      %vm673 = vweird.f32 %v666
      %vm674 = vweird.f32 %v667
      %vm675 = vmor %vm673, %vm674
      %v676 = vsel %vm675, %v667, %v672
      %v677 = vmul.f32 %v660, %v676
      %v678 = vld [vmem:[%s6] sm:$0x1]
      %v680 = vperm.slane %v678, 0
      %v682 = vmul.f32 %v677, %v680
      %v683 = vld [vmem:[%s7] sm:$0x1]
      %v685 = vperm.slane %v683, 0
      %v687 = vadd.f32 %v682, %v685
      %v688 = vpack.c.bf16 %v687, %v687
      %vm689 = vcmask 257024
      %690 = vst.msk [vmem:[%s314] sm:$0xf] %vm689, %v688
      %p691 = scmp.lt.s32.totalorder %s19, 1
      %s692 = scalar_select %p691, %s19, 1
      %s693 = smul.addr %s692, 4
      %s694 = scalar_lea.vmem %s8, %s693
      // Predicated region
      $region53: #{llama2_model_forward.7} parent=51 // pred_check
        %p695 = pneg %p215
      $region54: #{llama2_model_forward.7} parent=51 // pred_check_branch
        %697 = sbr.rel (%p695) target = $region56
      $region55: #{llama2_model_forward.7} parent=51 // pred_region
        _
      $region56: #{llama2_model_forward.7} parent=51 // pred_fallthru
        _
    $region52: #{llama2_model_forward.7} parent=5 // pred_fallthru
      _
    %p698 = scmp.le.s32.totalorder 2, %s14
    // Predicated region
    $region57: #{llama2_model_forward.7} parent=5 // pred_check
      %p699 = pneg %p698
    $region58: #{llama2_model_forward.7} parent=5 // pred_check_branch
      %701 = sbr.rel (%p699) target = $region60
    $region59: #{llama2_model_forward.7} parent=5 // pred_region
      %s702 = ssub.s32 %s14, 2
      // Predicated region
      $region61: #{llama2_model_forward.7} parent=59 // pred_check
        %p703 = pneg %p221
      $region62: #{llama2_model_forward.7} parent=59 // pred_check_branch
        %705 = sbr.rel (%p703) target = $region64
      $region63: #{llama2_model_forward.7} parent=59 // pred_region
        %p706 = scmp.lt.s32.totalorder %s20, 1
        %s707 = scalar_select %p706, %s20, 1
        %s708 = smul.addr %s707, 4
        %s709 = scalar_lea.vmem %s8, %s708
      $region64: #{llama2_model_forward.7} parent=59 // pred_fallthru
        _
    $region60: #{llama2_model_forward.7} parent=5 // pred_fallthru
      _
  $region6: #{llama2_model_forward.7} parent=0 // loop_footer
    %s18 = sadd.s32 1, %s14
  $region7: #{llama2_model_forward.7} parent=0 // loop_footer_branch
    %13 = sbr.rel target = $region3
  $region8: #{llama2_model_forward.7} parent=0 // loop_exit
    _

</llo_original>
